<compile_context>
chip_gen: v7x
topology: tpu7x:2x2x1
jax: 0.10.0
libtpu: 0.0.40
codegen_flags: <defaults>
</compile_context>

<pallas_src>
import functools

import jax
import jax.numpy as jnp
from jax.experimental import pallas as pl
from jax.experimental.pallas import tpu as pltpu

H1 = 512
H2 = 256
H3 = 1

_VMEM_BUDGET = 36 << 20        # keep comfortably inside v7x's 64 MiB physical VMEM
_VMEM_LIMIT_CAP = 56 << 20

# Remembers whether pipeline_mode=pl.Buffered(1) works on this install (None = untested).
_BUFFERED_STATE = {"ok": None}


def _device_kind():
    try:
        return jax.devices()[0].device_kind.lower()
    except Exception:
        return ""


def _bf16_elementwise_ok(kind):
    # bf16 VPU datapath exists on v6e / v7x; v5e and older emulate bf16 elementwise.
    return ("v6" in kind) or ("v7" in kind) or ("7x" in kind)


def _two_tensorcores(kind):
    return ("v7" in kind) or ("7x" in kind)


def mlp_head_kernel(x_ref, w1_ref, b1_ref, w2_ref, b2_ref, w3_ref, b3_ref, o_ref,
                    *, bf16_elementwise):
    # fc1 (+ bias, ReLU). Dropout == identity in eval mode.
    # x arrives f32; cast to bf16 on the VPU (hidden under the MXU), f32 accumulation.
    h = jnp.dot(x_ref[...].astype(jnp.bfloat16), w1_ref[...],
                preferred_element_type=jnp.float32)
    if bf16_elementwise:
        # v6e/v7x: bf16 VPU -> half the VALU elements and half the VMEM bytes for h1.
        h = jnp.maximum(h.astype(jnp.bfloat16) + b1_ref[...].astype(jnp.bfloat16), 0.0)
    else:
        # v5e: keep elementwise math in f32, cast once for the next matmul.
        h = jnp.maximum(h + b1_ref[...], 0.0).astype(jnp.bfloat16)

    # fc2 (+ bias, ReLU).
    h = jnp.dot(h, w2_ref[...], preferred_element_type=jnp.float32)
    if bf16_elementwise:
        h = jnp.maximum(h.astype(jnp.bfloat16) + b2_ref[...].astype(jnp.bfloat16), 0.0)
    else:
        h = jnp.maximum(h + b2_ref[...], 0.0)

    # fc3: output width 1 -> skip the MXU (an N=1 matmul costs a full push cadence and
    # forces a single-lane store). VPU multiply + XLU lane-reduce in f32, emitted
    # lane-dense (batch rows on the lane axis).
    logit = jnp.sum(h.astype(jnp.float32) * w3_ref[...], axis=-1)        # (tm,)
    o_ref[...] = (logit.reshape(1, 1, -1) + b3_ref[0]).astype(o_ref.dtype)

    # TODO(synk): training-mode dropout (p=0.3) would need pltpu.prng_seed +
    #             pltpu.prng_random_bits masking; omitted to match eval-mode forward.


def _vmem_bytes_estimate(tm, d):
    x_buf = 2 * tm * d * 4                       # double-buffered f32 x tile
    weights = 2 * (d * H1 + H1 * H2) * 2         # W1/W2 bf16 (worst case: double-buffered)
    small = 2 * (H1 + H2 + H2) * 4 * 2           # b1 / b2 / w3
    inter = 2 * tm * (H1 + H2) * 4               # f32 h1/h2 + temporaries
    out = 2 * tm * 4 * 2                         # double-buffered (1,1,tm) f32 output
    return x_buf + weights + small + inter + out


def _pick_tm(batch, d, two_cores):
    blocks = pl.cdiv(batch, 128)
    if two_cores and blocks > 1:
        blocks = pl.cdiv(blocks, 2)              # keep >= 2 grid tiles for the 2 TCs
    tm = 128 * min(max(blocks, 1), 8)            # cap at 1024 rows
    while tm > 128 and _vmem_bytes_estimate(tm, d) > _VMEM_BUDGET:
        tm -= 128
    return tm


def _resident_spec(shape, buffered):
    """BlockSpec for a VMEM-resident operand whose block never changes."""
    index_map = lambda i: (0,) * len(shape)
    if buffered:
        try:
            return pl.BlockSpec(shape, index_map, pipeline_mode=pl.Buffered(1))
        except TypeError:
            pass
    return pl.BlockSpec(shape, index_map)


def _run_pallas(x_pad, p, tm, num_tiles, d, bf16_elementwise, buffered, vmem_limit):
    kernel = functools.partial(mlp_head_kernel, bf16_elementwise=bf16_elementwise)
    return pl.pallas_call(
        kernel,
        # Lane-dense output: (num_tiles, 1, tm) with batch rows on the lane axis.
        out_shape=jax.ShapeDtypeStruct((num_tiles, 1, tm), jnp.float32),
        grid_spec=pltpu.PrefetchScalarGridSpec(
            num_scalar_prefetch=0,
            grid=(num_tiles,),
            in_specs=[
                pl.BlockSpec((tm, d), lambda i: (i, 0)),            # x row tile (streamed)
                _resident_spec((d, H1), buffered),                  # W1 (VMEM resident)
                _resident_spec((1, H1), buffered),                  # b1
                _resident_spec((H1, H2), buffered),                 # W2 (VMEM resident)
                _resident_spec((1, H2), buffered),                  # b2
                _resident_spec((1, H2), buffered),                  # w3 row vector
                pl.BlockSpec(memory_space=pltpu.MemorySpace.SMEM),  # b3 scalar
            ],
            out_specs=pl.BlockSpec((1, 1, tm), lambda i: (i, 0, 0)),
        ),
        compiler_params=pltpu.CompilerParams(
            dimension_semantics=("parallel",),
            vmem_limit_bytes=vmem_limit,
        ),
    )(x_pad, p["w1"], p["b1"], p["w2"], p["b2"], p["w3"], p["b3"])


def prepare_params(params):
    """One-time conversion to kernel layout/dtypes. Do NOT redo this per call."""
    return {
        "w1": params["w1"].astype(jnp.bfloat16),               # (D, 512)
        "b1": params["b1"].reshape(1, H1).astype(jnp.float32),
        "w2": params["w2"].astype(jnp.bfloat16),               # (512, 256)
        "b2": params["b2"].reshape(1, H2).astype(jnp.float32),
        "w3": params["w3"].reshape(1, H2).astype(jnp.float32), # row vector for VPU/XLU fc3
        "b3": params["b3"].reshape(1).astype(jnp.float32),     # SMEM scalar
    }


def mlp_head(x, prepared, *, tm=None):
    """x: (B, D) float32. prepared: output of prepare_params()."""
    B, D = x.shape

    kind = _device_kind()
    bf16_elementwise = _bf16_elementwise_ok(kind)
    two_cores = _two_tensorcores(kind)

    if tm is None:
        tm = _pick_tm(B, D, two_cores)
    tm = max(128, 128 * (tm // 128))            # lane-dense output needs a multiple of 128

    num_tiles = pl.cdiv(B, tm)
    B_pad = num_tiles * tm
    if B_pad != B:
        # Zero-pad the ragged last tile. Padded rows produce bias-only garbage logits,
        # so the [:B] slice below is mandatory. (For tiny batches this pad + slice is
        # the only wrapper-side work; all casts now live inside the kernel.)
        x = jnp.pad(x, ((0, B_pad - B), (0, 0)))

    vmem_limit = min(max(32 << 20, int(1.5 * _vmem_bytes_estimate(tm, D))),
                     _VMEM_LIMIT_CAP)

    out_t = None
    if _BUFFERED_STATE["ok"] is not False:
        try:
            out_t = _run_pallas(x, prepared, tm, num_tiles, D,
                                bf16_elementwise, True, vmem_limit)
            _BUFFERED_STATE["ok"] = True
        except Exception:
            _BUFFERED_STATE["ok"] = False
    if _BUFFERED_STATE["ok"] is False:
        out_t = _run_pallas(x, prepared, tm, num_tiles, D,
                            bf16_elementwise, False, vmem_limit)

    return out_t.reshape(B_pad, 1)[:B]


def init_params(key, input_shape):
    """Deterministic synthetic parameters with PyTorch-Linear-like scaling,
    stored pre-transposed as (in_features, out_features)."""
    k1, k2, k3, k4, k5, k6 = jax.random.split(key, 6)

    def lin(kw, kb, fan_in, fan_out):
        bound = 1.0 / jnp.sqrt(fan_in)
        w = jax.random.uniform(kw, (fan_in, fan_out), jnp.float32, -bound, bound)
        b = jax.random.uniform(kb, (1, fan_out), jnp.float32, -bound, bound)
        return w, b

    w1, b1 = lin(k1, k2, input_shape, H1)
    w2, b2 = lin(k3, k4, H1, H2)
    w3, b3 = lin(k5, k6, H2, H3)
    return {"w1": w1, "b1": b1, "w2": w2, "b2": b2, "w3": w3, "b3": b3}


def mlp_head_ref(x, p, *, bf16_elementwise):
    """Pure-JAX reference mirroring the kernel's precision choices exactly."""
    h = jnp.dot(x.astype(jnp.bfloat16), p["w1"], preferred_element_type=jnp.float32)
    if bf16_elementwise:
        h = jnp.maximum(h.astype(jnp.bfloat16) + p["b1"].astype(jnp.bfloat16), 0.0)
    else:
        h = jnp.maximum(h + p["b1"], 0.0).astype(jnp.bfloat16)
    h = jnp.dot(h, p["w2"], preferred_element_type=jnp.float32)
    if bf16_elementwise:
        h = jnp.maximum(h.astype(jnp.bfloat16) + p["b2"].astype(jnp.bfloat16), 0.0)
    else:
        h = jnp.maximum(h + p["b2"], 0.0)
    logit = jnp.sum(h.astype(jnp.float32) * p["w3"], axis=-1, keepdims=True)
    return logit + p["b3"]


if __name__ == "__main__":
    key = jax.random.PRNGKey(0)
    kx, kp = jax.random.split(key)

    B, D = 16, 32                          # small shapes: batch=16, input_shape=32
    x = jax.random.normal(kx, (B, D), jnp.float32)
    params = init_params(kp, D)
    prepared = prepare_params(params)      # one-time bf16/layout conversion

    out = mlp_head(x, prepared)
    jax.block_until_ready(out)

    bf16_ew = _bf16_elementwise_ok(_device_kind())
    ref = mlp_head_ref(x, prepared, bf16_elementwise=bf16_ew)

    assert out.shape == (B, 1)
    assert jnp.allclose(out, ref, atol=2e-2, rtol=2e-2), "mismatch vs JAX reference"
    print("KERNEL_OK")
</pallas_src>

<mosaic_0001>
module attributes {stable_mosaic.version = 11 : i64} {
  func.func @mlp_head_kernel(%arg0: i32, %arg1: memref<128x32xf32, #tpu.memory_space<vmem>>, %arg2: memref<32x512xbf16, #tpu.memory_space<vmem>>, %arg3: memref<1x512xf32, #tpu.memory_space<vmem>>, %arg4: memref<512x256xbf16, #tpu.memory_space<vmem>>, %arg5: memref<1x256xf32, #tpu.memory_space<vmem>>, %arg6: memref<1x256xf32, #tpu.memory_space<vmem>>, %arg7: memref<1xf32, #tpu.memory_space<smem>>, %arg8: memref<1x1x128xf32, #tpu.memory_space<vmem>>) attributes {dimension_semantics = [#tpu.dimension_semantics<parallel>], iteration_bounds = array<i64: 1>, scalar_prefetch = 0 : i64, scratch_operands = 0 : i64, tpu.core_type = #tpu.core_type<tc>, window_params = [{transform_indices = @transform_0, window_bounds = array<i64: 128, 32>}, {pipeline_mode = #tpu.pipeline_mode<synchronous>, transform_indices = @transform_1, window_bounds = array<i64: 32, 512>}, {pipeline_mode = #tpu.pipeline_mode<synchronous>, transform_indices = @transform_2, window_bounds = array<i64: 1, 512>}, {pipeline_mode = #tpu.pipeline_mode<synchronous>, transform_indices = @transform_3, window_bounds = array<i64: 512, 256>}, {pipeline_mode = #tpu.pipeline_mode<synchronous>, transform_indices = @transform_4, window_bounds = array<i64: 1, 256>}, {pipeline_mode = #tpu.pipeline_mode<synchronous>, transform_indices = @transform_5, window_bounds = array<i64: 1, 256>}, {transform_indices = @transform_6, window_bounds = array<i64: 1>}, {transform_indices = @transform_7, window_bounds = array<i64: 1, 1, 128>}]} {
    %c0 = arith.constant 0 : index
    %c0_0 = arith.constant 0 : index
    %0 = vector.load %arg1[%c0, %c0_0] : memref<128x32xf32, #tpu.memory_space<vmem>>, vector<128x32xf32>
    %1 = arith.truncf %0 : vector<128x32xf32> to vector<128x32xbf16>
    %c0_1 = arith.constant 0 : index
    %c0_2 = arith.constant 0 : index
    %2 = vector.load %arg2[%c0_1, %c0_2] : memref<32x512xbf16, #tpu.memory_space<vmem>>, vector<32x512xbf16>
    %cst = arith.constant dense<0.000000e+00> : vector<128x512xf32>
    %3 = tpu.matmul %1, %2, %cst {dimension_numbers = #tpu.dot_dimension_numbers<[1], [0], [0], [1], [0, 0, 1, 1], [], []>} : vector<128x32xbf16>, vector<32x512xbf16>, vector<128x512xf32> -> vector<128x512xf32>
    %c0_3 = arith.constant 0 : index
    %c0_4 = arith.constant 0 : index
    %4 = vector.load %arg3[%c0_3, %c0_4] : memref<1x512xf32, #tpu.memory_space<vmem>>, vector<1x512xf32>
    %5 = vector.broadcast %4 : vector<1x512xf32> to vector<128x512xf32>
    %6 = arith.addf %3, %5 : vector<128x512xf32>
    %cst_5 = arith.constant 0.000000e+00 : f32
    %7 = vector.broadcast %cst_5 : f32 to vector<128x512xf32>
    %8 = arith.maximumf %6, %7 : vector<128x512xf32>
    %9 = arith.truncf %8 : vector<128x512xf32> to vector<128x512xbf16>
    %c0_6 = arith.constant 0 : index
    %c0_7 = arith.constant 0 : index
    %10 = vector.load %arg4[%c0_6, %c0_7] : memref<512x256xbf16, #tpu.memory_space<vmem>>, vector<512x256xbf16>
    %cst_8 = arith.constant dense<0.000000e+00> : vector<128x256xf32>
    %11 = tpu.matmul %9, %10, %cst_8 {dimension_numbers = #tpu.dot_dimension_numbers<[1], [0], [0], [1], [0, 0, 1, 1], [], []>} : vector<128x512xbf16>, vector<512x256xbf16>, vector<128x256xf32> -> vector<128x256xf32>
    %c0_9 = arith.constant 0 : index
    %c0_10 = arith.constant 0 : index
    %12 = vector.load %arg5[%c0_9, %c0_10] : memref<1x256xf32, #tpu.memory_space<vmem>>, vector<1x256xf32>
    %13 = vector.broadcast %12 : vector<1x256xf32> to vector<128x256xf32>
    %14 = arith.addf %11, %13 : vector<128x256xf32>
    %cst_11 = arith.constant 0.000000e+00 : f32
    %15 = vector.broadcast %cst_11 : f32 to vector<128x256xf32>
    %16 = arith.maximumf %14, %15 : vector<128x256xf32>
    %c0_12 = arith.constant 0 : index
    %c0_13 = arith.constant 0 : index
    %17 = vector.load %arg6[%c0_12, %c0_13] : memref<1x256xf32, #tpu.memory_space<vmem>>, vector<1x256xf32>
    %18 = vector.broadcast %17 : vector<1x256xf32> to vector<128x256xf32>
    %19 = arith.mulf %16, %18 : vector<128x256xf32>
    %cst_14 = arith.constant dense<0.000000e+00> : vector<128xf32>
    %20 = vector.multi_reduction <add>, %19, %cst_14 [1] : vector<128x256xf32> to vector<128xf32>
    %21 = vector.shape_cast %20 : vector<128xf32> to vector<1x1x128xf32>
    %c0_15 = arith.constant 0 : index
    %22 = memref.load %arg7[%c0_15] : memref<1xf32, #tpu.memory_space<smem>>
    %23 = vector.broadcast %22 : f32 to vector<1x1x128xf32>
    %24 = arith.addf %21, %23 : vector<1x1x128xf32>
    %c0_16 = arith.constant 0 : index
    %c0_17 = arith.constant 0 : index
    %c0_18 = arith.constant 0 : index
    %25 = vector.load %arg8[%c0_16, %c0_17, %c0_18] : memref<1x1x128xf32, #tpu.memory_space<vmem>>, vector<1x1x128xf32>
    tpu.vector_store %arg8[%c0_16, %c0_17, %c0_18], %24 {strides = array<i32>} : memref<1x1x128xf32, #tpu.memory_space<vmem>>, vector<1x1x128xf32>,
    return
  }
  func.func @transform_0(%arg0: i32) -> (i32, i32) {
    %c0_i32 = arith.constant 0 : i32
    %c0_i32_0 = arith.constant 0 : i32
    return %arg0, %c0_i32 : i32, i32
  }
  func.func @transform_1(%arg0: i32) -> (i32, i32) {
    %c0_i32 = arith.constant 0 : i32
    %c0_i32_0 = arith.constant 0 : i32
    %c0_i32_1 = arith.constant 0 : i32
    return %c0_i32, %c0_i32_0 : i32, i32
  }
  func.func @transform_2(%arg0: i32) -> (i32, i32) {
    %c0_i32 = arith.constant 0 : i32
    %c0_i32_0 = arith.constant 0 : i32
    %c0_i32_1 = arith.constant 0 : i32
    return %c0_i32, %c0_i32_0 : i32, i32
  }
  func.func @transform_3(%arg0: i32) -> (i32, i32) {
    %c0_i32 = arith.constant 0 : i32
    %c0_i32_0 = arith.constant 0 : i32
    %c0_i32_1 = arith.constant 0 : i32
    return %c0_i32, %c0_i32_0 : i32, i32
  }
  func.func @transform_4(%arg0: i32) -> (i32, i32) {
    %c0_i32 = arith.constant 0 : i32
    %c0_i32_0 = arith.constant 0 : i32
    %c0_i32_1 = arith.constant 0 : i32
    return %c0_i32, %c0_i32_0 : i32, i32
  }
  func.func @transform_5(%arg0: i32) -> (i32, i32) {
    %c0_i32 = arith.constant 0 : i32
    %c0_i32_0 = arith.constant 0 : i32
    %c0_i32_1 = arith.constant 0 : i32
    return %c0_i32, %c0_i32_0 : i32, i32
  }
  func.func @transform_6(%arg0: i32) -> i32 {
    %c0_i32 = arith.constant 0 : i32
    %c0_i32_0 = arith.constant 0 : i32
    return %c0_i32 : i32
  }
  func.func @transform_7(%arg0: i32) -> (i32, i32, i32) {
    %c0_i32 = arith.constant 0 : i32
    %c0_i32_0 = arith.constant 0 : i32
    %c0_i32_1 = arith.constant 0 : i32
    return %arg0, %c0_i32, %c0_i32_0 : i32, i32, i32
  }
}

module attributes {stable_mosaic.version = 11 : i64} {
  func.func @mlp_head_kernel(%arg0: i32, %arg1: memref<128x32xf32, #tpu.memory_space<vmem>>, %arg2: memref<32x512xbf16, #tpu.memory_space<vmem>>, %arg3: memref<1x512xf32, #tpu.memory_space<vmem>>, %arg4: memref<512x256xbf16, #tpu.memory_space<vmem>>, %arg5: memref<1x256xf32, #tpu.memory_space<vmem>>, %arg6: memref<1x256xf32, #tpu.memory_space<vmem>>, %arg7: memref<1xf32, #tpu.memory_space<smem>>, %arg8: memref<1x1x128xf32, #tpu.memory_space<vmem>>) attributes {dimension_semantics = [#tpu.dimension_semantics<parallel>], iteration_bounds = array<i64: 1>, scalar_prefetch = 0 : i64, scratch_operands = 0 : i64, tpu.core_type = #tpu.core_type<tc>, window_params = [{transform_indices = @transform_0, window_bounds = array<i64: 128, 32>}, {pipeline_mode = #tpu.pipeline_mode<synchronous>, transform_indices = @transform_1, window_bounds = array<i64: 32, 512>}, {pipeline_mode = #tpu.pipeline_mode<synchronous>, transform_indices = @transform_2, window_bounds = array<i64: 1, 512>}, {pipeline_mode = #tpu.pipeline_mode<synchronous>, transform_indices = @transform_3, window_bounds = array<i64: 512, 256>}, {pipeline_mode = #tpu.pipeline_mode<synchronous>, transform_indices = @transform_4, window_bounds = array<i64: 1, 256>}, {pipeline_mode = #tpu.pipeline_mode<synchronous>, transform_indices = @transform_5, window_bounds = array<i64: 1, 256>}, {transform_indices = @transform_6, window_bounds = array<i64: 1>}, {transform_indices = @transform_7, window_bounds = array<i64: 1, 1, 128>}]} {
    %c0 = arith.constant 0 : index
    %c0_0 = arith.constant 0 : index
    %0 = vector.load %arg1[%c0, %c0_0] : memref<128x32xf32, #tpu.memory_space<vmem>>, vector<128x32xf32>
    %1 = arith.truncf %0 : vector<128x32xf32> to vector<128x32xbf16>
    %c0_1 = arith.constant 0 : index
    %c0_2 = arith.constant 0 : index
    %2 = vector.load %arg2[%c0_1, %c0_2] : memref<32x512xbf16, #tpu.memory_space<vmem>>, vector<32x512xbf16>
    %cst = arith.constant dense<0.000000e+00> : vector<128x512xf32>
    %3 = tpu.matmul %1, %2, %cst {dimension_numbers = #tpu.dot_dimension_numbers<[1], [0], [0], [1], [0, 0, 1, 1], [], []>} : vector<128x32xbf16>, vector<32x512xbf16>, vector<128x512xf32> -> vector<128x512xf32>
    %c0_3 = arith.constant 0 : index
    %c0_4 = arith.constant 0 : index
    %4 = vector.load %arg3[%c0_3, %c0_4] : memref<1x512xf32, #tpu.memory_space<vmem>>, vector<1x512xf32>
    %5 = vector.broadcast %4 : vector<1x512xf32> to vector<128x512xf32>
    %6 = arith.addf %3, %5 : vector<128x512xf32>
    %cst_5 = arith.constant 0.000000e+00 : f32
    %7 = vector.broadcast %cst_5 : f32 to vector<128x512xf32>
    %8 = arith.maximumf %6, %7 : vector<128x512xf32>
    %9 = arith.truncf %8 : vector<128x512xf32> to vector<128x512xbf16>
    %c0_6 = arith.constant 0 : index
    %c0_7 = arith.constant 0 : index
    %10 = vector.load %arg4[%c0_6, %c0_7] : memref<512x256xbf16, #tpu.memory_space<vmem>>, vector<512x256xbf16>
    %cst_8 = arith.constant dense<0.000000e+00> : vector<128x256xf32>
    %11 = tpu.matmul %9, %10, %cst_8 {dimension_numbers = #tpu.dot_dimension_numbers<[1], [0], [0], [1], [0, 0, 1, 1], [], []>} : vector<128x512xbf16>, vector<512x256xbf16>, vector<128x256xf32> -> vector<128x256xf32>
    %c0_9 = arith.constant 0 : index
    %c0_10 = arith.constant 0 : index
    %12 = vector.load %arg5[%c0_9, %c0_10] : memref<1x256xf32, #tpu.memory_space<vmem>>, vector<1x256xf32>
    %13 = vector.broadcast %12 : vector<1x256xf32> to vector<128x256xf32>
    %14 = arith.addf %11, %13 : vector<128x256xf32>
    %cst_11 = arith.constant 0.000000e+00 : f32
    %15 = vector.broadcast %cst_11 : f32 to vector<128x256xf32>
    %16 = arith.maximumf %14, %15 : vector<128x256xf32>
    %c0_12 = arith.constant 0 : index
    %c0_13 = arith.constant 0 : index
    %17 = vector.load %arg6[%c0_12, %c0_13] : memref<1x256xf32, #tpu.memory_space<vmem>>, vector<1x256xf32>
    %18 = vector.broadcast %17 : vector<1x256xf32> to vector<128x256xf32>
    %19 = arith.mulf %16, %18 : vector<128x256xf32>
    %cst_14 = arith.constant dense<0.000000e+00> : vector<128xf32>
    %20 = vector.multi_reduction <add>, %19, %cst_14 [1] : vector<128x256xf32> to vector<128xf32>
    %21 = vector.shape_cast %20 : vector<128xf32> to vector<1x1x128xf32>
    %c0_15 = arith.constant 0 : index
    %22 = memref.load %arg7[%c0_15] : memref<1xf32, #tpu.memory_space<smem>>
    %23 = vector.broadcast %22 : f32 to vector<1x1x128xf32>
    %24 = arith.addf %21, %23 : vector<1x1x128xf32>
    %c0_16 = arith.constant 0 : index
    %c0_17 = arith.constant 0 : index
    %c0_18 = arith.constant 0 : index
    %25 = vector.load %arg8[%c0_16, %c0_17, %c0_18] : memref<1x1x128xf32, #tpu.memory_space<vmem>>, vector<1x1x128xf32>
    tpu.vector_store %arg8[%c0_16, %c0_17, %c0_18], %24 {strides = array<i32>} : memref<1x1x128xf32, #tpu.memory_space<vmem>>, vector<1x1x128xf32>,
    return
  }
  func.func @transform_0(%arg0: i32) -> (i32, i32) {
    %c0_i32 = arith.constant 0 : i32
    %c0_i32_0 = arith.constant 0 : i32
    return %arg0, %c0_i32 : i32, i32
  }
  func.func @transform_1(%arg0: i32) -> (i32, i32) {
    %c0_i32 = arith.constant 0 : i32
    %c0_i32_0 = arith.constant 0 : i32
    %c0_i32_1 = arith.constant 0 : i32
    return %c0_i32, %c0_i32_0 : i32, i32
  }
  func.func @transform_2(%arg0: i32) -> (i32, i32) {
    %c0_i32 = arith.constant 0 : i32
    %c0_i32_0 = arith.constant 0 : i32
    %c0_i32_1 = arith.constant 0 : i32
    return %c0_i32, %c0_i32_0 : i32, i32
  }
  func.func @transform_3(%arg0: i32) -> (i32, i32) {
    %c0_i32 = arith.constant 0 : i32
    %c0_i32_0 = arith.constant 0 : i32
    %c0_i32_1 = arith.constant 0 : i32
    return %c0_i32, %c0_i32_0 : i32, i32
  }
  func.func @transform_4(%arg0: i32) -> (i32, i32) {
    %c0_i32 = arith.constant 0 : i32
    %c0_i32_0 = arith.constant 0 : i32
    %c0_i32_1 = arith.constant 0 : i32
    return %c0_i32, %c0_i32_0 : i32, i32
  }
  func.func @transform_5(%arg0: i32) -> (i32, i32) {
    %c0_i32 = arith.constant 0 : i32
    %c0_i32_0 = arith.constant 0 : i32
    %c0_i32_1 = arith.constant 0 : i32
    return %c0_i32, %c0_i32_0 : i32, i32
  }
  func.func @transform_6(%arg0: i32) -> i32 {
    %c0_i32 = arith.constant 0 : i32
    %c0_i32_0 = arith.constant 0 : i32
    return %c0_i32 : i32
  }
  func.func @transform_7(%arg0: i32) -> (i32, i32, i32) {
    %c0_i32 = arith.constant 0 : i32
    %c0_i32_0 = arith.constant 0 : i32
    %c0_i32_1 = arith.constant 0 : i32
    return %arg0, %c0_i32, %c0_i32_0 : i32, i32, i32
  }
}

</mosaic_0001>

<llo_original>
// kernel: tpu_custom_call.1
$region0: #{tpu_custom_call.1}
  #allocation0 [shape = 'u32[]', space=smem, size = 0x4, offset = 0x4, fixed_abs, tag = 'smem constant byte address 0x4 - core index']
  #allocation1 [shape = 'u32[144,128]{1,0:T(1,128)}', space=vmem, size = 0x12000, scoped, tag = 'internal scratch']
  #allocation2 [shape = 'f32[1]{0:T(128)S(6)}', space=smem, size = 0x200, scoped, tag = 'scoped memory for tpu_custom_call.1']
  %s0 = inlined_call_operand.vmem [shape: f32[128,32], index: 0, kind: input, shape index: {}]
  %s1 = inlined_call_operand.vmem [shape: bf16[32,512], index: 1, kind: input, shape index: {}]
  %s2 = inlined_call_operand.vmem [shape: f32[1,512], index: 2, kind: input, shape index: {}]
  %s3 = inlined_call_operand.hbm [shape: bf16[512,256], index: 3, kind: input, shape index: {}]
  %s4 = inlined_call_operand.vmem [shape: f32[1,256], index: 4, kind: input, shape index: {}]
  %s5 = inlined_call_operand.vmem [shape: f32[1,256], index: 5, kind: input, shape index: {}]
  %s6 = inlined_call_operand.<no memory space> [shape: f32[1], index: 6, kind: input, shape index: {}]
  %s7 = inlined_call_operand.hbm [shape: f32[1,1,128], index: 7, kind: output, shape index: {}]
  %s8 = sld [smem:[#allocation0]]
  $region42: #{tpu_custom_call.1} parent=0
    _
  %s10 = ssub.s32 1, %s8
  %s11 = scalar_select 0, %s10, %s8
  %12 = sst [smem:[#allocation2]] %s6
  $region1: #{tpu_custom_call.1} parent=0
    #allocation3 [shape = 'u8[262144]{0}', space=vmem, size = 0x40000, scoped, tag = 'input window, operand 3, single buffered']
    #allocation4 [shape = 's32[1]{0}', space=sflag, size = 0x4, scoped, tag = 'scoped memory for tpu_custom_call.1']
    #allocation5 [shape = 's32[1]{0}', space=sflag, size = 0x4, scoped, tag = 'scoped memory for tpu_custom_call.1']
    #allocation6 [shape = 'u8[512]{0}', space=vmem, size = 0x400, scoped, tag = 'output window, operand 0, single buffered']
    %13 = vsyncpa [#allocation4], 0
    %14 = vsyncpa [#allocation5], 0
    // Predicated region
    $region2: #{tpu_custom_call.1} parent=1 // pred_check
      _
    $region3: #{tpu_custom_call.1} parent=1 // pred_check_branch
      %16 = sbr.rel (0) target = $region5
    $region4: #{tpu_custom_call.1} parent=1 // pred_region
      _
    $region5: #{tpu_custom_call.1} parent=1 // pred_fallthru
      _
    // Predicated region
    $region6: #{tpu_custom_call.1} parent=1 // pred_check
      _
    $region7: #{tpu_custom_call.1} parent=1 // pred_check_branch
      %18 = sbr.rel (0) target = $region9
    $region8: #{tpu_custom_call.1} parent=1 // pred_region
      _
    $region9: #{tpu_custom_call.1} parent=1 // pred_fallthru
      _
    // Predicated region
    $region10: #{tpu_custom_call.1} parent=1 // pred_check
      _
    $region11: #{tpu_custom_call.1} parent=1 // pred_check_branch
      %20 = sbr.rel (0) target = $region13
    $region12: #{tpu_custom_call.1} parent=1 // pred_region
      _
    $region13: #{tpu_custom_call.1} parent=1 // pred_fallthru
      _
    // Predicated region
    $region14: #{tpu_custom_call.1} parent=1 // pred_check
      _
    $region15: #{tpu_custom_call.1} parent=1 // pred_check_branch
      %22 = sbr.rel (0) target = $region17
    $region16: #{tpu_custom_call.1} parent=1 // pred_region
      %s24 = ssub.s32 8192, 8192
      %25 = vsyncadd [#allocation4], %s24
      %s26 = sshll.u32 [#allocation3], 4
      %s27 = int_to_ptr.vmem [resolvable:$true] %s26
      %32 = dma.hbm_to_vmem [thread:$0]  %s3, 8192, %s27, [#allocation4], 128, 128, 8
    $region17: #{tpu_custom_call.1} parent=1 // pred_fallthru
      _
    // Predicated region
    $region18: #{tpu_custom_call.1} parent=1 // pred_check
      _
    $region19: #{tpu_custom_call.1} parent=1 // pred_check_branch
      %34 = sbr.rel (0) target = $region21
    $region20: #{tpu_custom_call.1} parent=1 // pred_region
      _
    $region21: #{tpu_custom_call.1} parent=1 // pred_fallthru
      _
    // Predicated region
    $region22: #{tpu_custom_call.1} parent=1 // pred_check
      _
    $region23: #{tpu_custom_call.1} parent=1 // pred_check_branch
      %36 = sbr.rel (0) target = $region25
    $region24: #{tpu_custom_call.1} parent=1 // pred_region
      _
    $region25: #{tpu_custom_call.1} parent=1 // pred_fallthru
      _
    // Predicated region
    $region26: #{tpu_custom_call.1} parent=1 // pred_check
      _
    $region27: #{tpu_custom_call.1} parent=1 // pred_check_branch
      %38 = sbr.rel (0) target = $region29
    $region28: #{tpu_custom_call.1} parent=1 // pred_region
      _
    $region29: #{tpu_custom_call.1} parent=1 // pred_fallthru
      _
    // Predicated region
    $region30: #{tpu_custom_call.1} parent=1 // pred_check
      _
    $region31: #{tpu_custom_call.1} parent=1 // pred_check_branch
      %40 = sbr.rel (0) target = $region33
    $region32: #{tpu_custom_call.1} parent=1 // pred_region
      %41 = dma.done [#allocation4], 8192
    $region33: #{tpu_custom_call.1} parent=1 // pred_fallthru
      _
    %v43 = vld [vmem:[%s0] sm:$0xff]
    %v44 = vld [vmem:[%s0 + $0x8] sm:$0xff]
    %v45 = vld [vmem:[%s0 + $0x10] sm:$0xff]
    %v46 = vld [vmem:[%s0 + $0x18] sm:$0xff]
    %v47 = vld [vmem:[%s0 + $0x20] sm:$0xff]
    %v48 = vld [vmem:[%s0 + $0x28] sm:$0xff]
    %v49 = vld [vmem:[%s0 + $0x30] sm:$0xff]
    %v50 = vld [vmem:[%s0 + $0x38] sm:$0xff]
    %v51 = vld [vmem:[%s0 + $0x40] sm:$0xff]
    %v52 = vld [vmem:[%s0 + $0x48] sm:$0xff]
    %v53 = vld [vmem:[%s0 + $0x50] sm:$0xff]
    %v54 = vld [vmem:[%s0 + $0x58] sm:$0xff]
    %v55 = vld [vmem:[%s0 + $0x60] sm:$0xff]
    %v56 = vld [vmem:[%s0 + $0x68] sm:$0xff]
    %v57 = vld [vmem:[%s0 + $0x70] sm:$0xff]
    %v58 = vld [vmem:[%s0 + $0x78] sm:$0xff]
    %v59 = vpack.c.bf16 %v44, %v43
    %v60 = vpack.c.bf16 %v46, %v45
    %v61 = vpack.c.bf16 %v48, %v47
    %v62 = vpack.c.bf16 %v50, %v49
    %v63 = vpack.c.bf16 %v52, %v51
    %v64 = vpack.c.bf16 %v54, %v53
    %v65 = vpack.c.bf16 %v56, %v55
    %v66 = vpack.c.bf16 %v58, %v57
    %v67 = vld [vmem:[%s1] sm:$0xff]
    %v68 = vld [vmem:[%s1 + $0x8] sm:$0xff]
    %v69 = vld [vmem:[%s1 + $0x10] sm:$0xff]
    %v70 = vld [vmem:[%s1 + $0x18] sm:$0xff]
    %v71 = vld [vmem:[%s1 + $0x20] sm:$0xff]
    %v72 = vld [vmem:[%s1 + $0x28] sm:$0xff]
    %v73 = vld [vmem:[%s1 + $0x30] sm:$0xff]
    %v74 = vld [vmem:[%s1 + $0x38] sm:$0xff]
    %v75 = vld [vmem:[%s2] sm:$0xf]
    %v77 = vlaneseq
    %v78 = vshrl.u32 %v77, 7
    %v79 = vsub.s32 0, %v78
    %v80 = vrot.slane %v75, %v79
    %v81 = vlaneseq
    %v82 = vshrl.u32 %v81, 7
    %v83 = vsub.s32 1, %v82
    %v84 = vrot.slane %v75, %v83
    %v85 = vlaneseq
    %v86 = vshrl.u32 %v85, 7
    %v87 = vsub.s32 2, %v86
    %v88 = vrot.slane %v75, %v87
    %v89 = vlaneseq
    %v90 = vshrl.u32 %v89, 7
    %v91 = vsub.s32 3, %v90
    %v92 = vrot.slane %v75, %v91
    %v105 = vunpack.c.l.b16 %v67
    %v106 = vunpack.c.h.b16 %v67
    %v107 = vunpack.c.l.b16 %v68
    %v108 = vunpack.c.h.b16 %v68
    %v109 = vunpack.c.l.b16 %v69
    %v110 = vunpack.c.h.b16 %v69
    %v111 = vunpack.c.l.b16 %v70
    %v112 = vunpack.c.h.b16 %v70
    %v113 = vunpack.c.l.b16 %v71
    %v114 = vunpack.c.h.b16 %v71
    %v115 = vunpack.c.l.b16 %v72
    %v116 = vunpack.c.h.b16 %v72
    %v117 = vunpack.c.l.b16 %v73
    %v118 = vunpack.c.h.b16 %v73
    %v119 = vunpack.c.l.b16 %v74
    %v120 = vunpack.c.h.b16 %v74
    %v121 = vpack.c.b16 %v109, %v105
    %v122 = vpack.c.b16 %v110, %v106
    %v123 = vpack.c.b16 %v111, %v107
    %v124 = vpack.c.b16 %v112, %v108
    %v125 = vpack.c.b16 %v117, %v113
    %v126 = vpack.c.b16 %v118, %v114
    %v127 = vpack.c.b16 %v119, %v115
    %v128 = vpack.c.b16 %v120, %v116
    %vm137 = vcmask 261120
    %v139 = vsel %vm137, %v59, 0
    %v142 = vsel %vm137, %v60, 0
    %v145 = vsel %vm137, %v61, 0
    %v148 = vsel %vm137, %v62, 0
    %v151 = vsel %vm137, %v63, 0
    %v154 = vsel %vm137, %v64, 0
    %v157 = vsel %vm137, %v65, 0
    %v160 = vsel %vm137, %v66, 0
    %162 = vmatprep.subr.bf16.mxu0 %v122
    %163 = vmatpush1.bf16.msra.mxu0 %v121
    %164 = vmatprep.subr.bf16.mxu0 %v126
    %165 = vmatpush1.bf16.msra.mxu0 %v125
    %166 = vmatprep.subr.bf16.mxu0 0
    %167 = vmatpush1.bf16.msra.mxu0 0
    %168 = vmatprep.subr.bf16.mxu0 0
    %169 = vmatpush1.bf16.msra.mxu0 0
    %170 = vmatprep.subr.bf16.mxu0 0
    %171 = vmatpush1.bf16.msra.mxu0 0
    %172 = vmatprep.subr.bf16.mxu0 0
    %173 = vmatpush1.bf16.msra.mxu0 0
    %174 = vmatprep.subr.bf16.mxu0 0
    %175 = vmatpush1.bf16.msra.mxu0 0
    %176 = vmatprep.subr.bf16.mxu0 0
    %177 = vmatpush1.bf16.msra.mxu0 0
    %178 = vmatprep.subr.bf16.mxu0 0
    %179 = vmatpush1.bf16.msra.mxu0 0
    %180 = vmatprep.subr.bf16.mxu0 0
    %181 = vmatpush1.bf16.msra.mxu0 0
    %182 = vmatprep.subr.bf16.mxu0 0
    %183 = vmatpush1.bf16.msra.mxu0 0
    %184 = vmatprep.subr.bf16.mxu0 0
    %185 = vmatpush1.bf16.msra.mxu0 0
    %186 = vmatprep.subr.bf16.mxu0 0
    %187 = vmatpush1.bf16.msra.mxu0 0
    %188 = vmatprep.subr.bf16.mxu0 0
    %189 = vmatpush1.bf16.msra.mxu0 0
    %190 = vmatprep.subr.bf16.mxu0 0
    %191 = vmatpush1.bf16.msra.mxu0 0
    %192 = vmatprep.subr.bf16.mxu0 0
    %193 = vmatpush1.bf16.msra.mxu0 0
    %194 = vmatprep.mubr.bf16.mxu0 0
    %195 = vmatmul.mubr.bf16.gmra.mrb[0].mxu0 %v139
    %v196 = vpop.f32.mrb[0].mxu0
    %v197 = vadd.f32 %v80, %v196
    %v198 = vpop.f32.mrb[0].mxu0
    %v199 = vadd.f32 %v84, %v198
    %v200 = vpop.f32.mrb[0].mxu0
    %v201 = vadd.f32 %v80, %v200
    %v202 = vpop.f32.mrb[0].mxu0
    %v203 = vadd.f32 %v84, %v202
    %204 = vmatprep.mubr.bf16.mxu0 0
    %205 = vmatmul.mubr.bf16.gmra.mrb[0].mxu0 %v142
    %v206 = vpop.f32.mrb[0].mxu0
    %v207 = vadd.f32 %v80, %v206
    %v208 = vpop.f32.mrb[0].mxu0
    %v209 = vadd.f32 %v84, %v208
    %v210 = vpop.f32.mrb[0].mxu0
    %v211 = vadd.f32 %v80, %v210
    %v212 = vpop.f32.mrb[0].mxu0
    %v213 = vadd.f32 %v84, %v212
    %214 = vmatprep.mubr.bf16.mxu0 0
    %215 = vmatmul.mubr.bf16.gmra.mrb[0].mxu0 %v145
    %v216 = vpop.f32.mrb[0].mxu0
    %v217 = vadd.f32 %v80, %v216
    %v218 = vpop.f32.mrb[0].mxu0
    %v219 = vadd.f32 %v84, %v218
    %v220 = vpop.f32.mrb[0].mxu0
    %v221 = vadd.f32 %v80, %v220
    %v222 = vpop.f32.mrb[0].mxu0
    %v223 = vadd.f32 %v84, %v222
    %224 = vmatprep.mubr.bf16.mxu0 0
    %225 = vmatmul.mubr.bf16.gmra.mrb[0].mxu0 %v148
    %v226 = vpop.f32.mrb[0].mxu0
    %v227 = vadd.f32 %v80, %v226
    %v228 = vpop.f32.mrb[0].mxu0
    %v229 = vadd.f32 %v84, %v228
    %v230 = vpop.f32.mrb[0].mxu0
    %v231 = vadd.f32 %v80, %v230
    %v232 = vpop.f32.mrb[0].mxu0
    %v233 = vadd.f32 %v84, %v232
    %234 = vmatprep.mubr.bf16.mxu0 0
    %235 = vmatmul.mubr.bf16.gmra.mrb[0].mxu0 %v151
    %v236 = vpop.f32.mrb[0].mxu0
    %v237 = vadd.f32 %v80, %v236
    %v238 = vpop.f32.mrb[0].mxu0
    %v239 = vadd.f32 %v84, %v238
    %v240 = vpop.f32.mrb[0].mxu0
    %v241 = vadd.f32 %v80, %v240
    %v242 = vpop.f32.mrb[0].mxu0
    %v243 = vadd.f32 %v84, %v242
    %244 = vmatprep.mubr.bf16.mxu0 0
    %245 = vmatmul.mubr.bf16.gmra.mrb[0].mxu0 %v154
    %v246 = vpop.f32.mrb[0].mxu0
    %v247 = vadd.f32 %v80, %v246
    %v248 = vpop.f32.mrb[0].mxu0
    %v249 = vadd.f32 %v84, %v248
    %v250 = vpop.f32.mrb[0].mxu0
    %v251 = vadd.f32 %v80, %v250
    %v252 = vpop.f32.mrb[0].mxu0
    %v253 = vadd.f32 %v84, %v252
    %254 = vmatprep.mubr.bf16.mxu0 0
    %255 = vmatmul.mubr.bf16.gmra.mrb[0].mxu0 %v157
    %v256 = vpop.f32.mrb[0].mxu0
    %v257 = vadd.f32 %v80, %v256
    %v258 = vpop.f32.mrb[0].mxu0
    %v259 = vadd.f32 %v84, %v258
    %v260 = vpop.f32.mrb[0].mxu0
    %v261 = vadd.f32 %v80, %v260
    %v262 = vpop.f32.mrb[0].mxu0
    %v263 = vadd.f32 %v84, %v262
    %264 = vmatprep.mubr.bf16.mxu0 0
    %265 = vmatmul.mubr.bf16.gmra.mrb[0].mxu0 %v160
    %v266 = vpop.f32.mrb[0].mxu0
    %v267 = vadd.f32 %v80, %v266
    %v268 = vpop.f32.mrb[0].mxu0
    %v269 = vadd.f32 %v84, %v268
    %v270 = vpop.f32.mrb[0].mxu0
    %v271 = vadd.f32 %v80, %v270
    %v272 = vpop.f32.mrb[0].mxu0
    %v273 = vadd.f32 %v84, %v272
    %274 = vdwg.mxu0
    %275 = vmatprep.subr.bf16.mxu0 %v124
    %276 = vmatpush1.bf16.msra.mxu0 %v123
    %277 = vmatprep.subr.bf16.mxu0 %v128
    %278 = vmatpush1.bf16.msra.mxu0 %v127
    %279 = vmatprep.subr.bf16.mxu0 0
    %280 = vmatpush1.bf16.msra.mxu0 0
    %281 = vmatprep.subr.bf16.mxu0 0
    %282 = vmatpush1.bf16.msra.mxu0 0
    %283 = vmatprep.subr.bf16.mxu0 0
    %284 = vmatpush1.bf16.msra.mxu0 0
    %285 = vmatprep.subr.bf16.mxu0 0
    %286 = vmatpush1.bf16.msra.mxu0 0
    %287 = vmatprep.subr.bf16.mxu0 0
    %288 = vmatpush1.bf16.msra.mxu0 0
    %289 = vmatprep.subr.bf16.mxu0 0
    %290 = vmatpush1.bf16.msra.mxu0 0
    %291 = vmatprep.subr.bf16.mxu0 0
    %292 = vmatpush1.bf16.msra.mxu0 0
    %293 = vmatprep.subr.bf16.mxu0 0
    %294 = vmatpush1.bf16.msra.mxu0 0
    %295 = vmatprep.subr.bf16.mxu0 0
    %296 = vmatpush1.bf16.msra.mxu0 0
    %297 = vmatprep.subr.bf16.mxu0 0
    %298 = vmatpush1.bf16.msra.mxu0 0
    %299 = vmatprep.subr.bf16.mxu0 0
    %300 = vmatpush1.bf16.msra.mxu0 0
    %301 = vmatprep.subr.bf16.mxu0 0
    %302 = vmatpush1.bf16.msra.mxu0 0
    %303 = vmatprep.subr.bf16.mxu0 0
    %304 = vmatpush1.bf16.msra.mxu0 0
    %305 = vmatprep.subr.bf16.mxu0 0
    %306 = vmatpush1.bf16.msra.mxu0 0
    %307 = vmatprep.mubr.bf16.mxu0 0
    %308 = vmatmul.mubr.bf16.gmra.mrb[0].mxu0 %v139
    %v309 = vpop.f32.mrb[0].mxu0
    %v310 = vadd.f32 %v88, %v309
    %v311 = vpop.f32.mrb[0].mxu0
    %v312 = vadd.f32 %v92, %v311
    %v313 = vpop.f32.mrb[0].mxu0
    %v314 = vadd.f32 %v88, %v313
    %v315 = vpop.f32.mrb[0].mxu0
    %v316 = vadd.f32 %v92, %v315
    %317 = vmatprep.mubr.bf16.mxu0 0
    %318 = vmatmul.mubr.bf16.gmra.mrb[0].mxu0 %v142
    %v319 = vpop.f32.mrb[0].mxu0
    %v320 = vadd.f32 %v88, %v319
    %v321 = vpop.f32.mrb[0].mxu0
    %v322 = vadd.f32 %v92, %v321
    %v323 = vpop.f32.mrb[0].mxu0
    %v324 = vadd.f32 %v88, %v323
    %v325 = vpop.f32.mrb[0].mxu0
    %v326 = vadd.f32 %v92, %v325
    %327 = vmatprep.mubr.bf16.mxu0 0
    %328 = vmatmul.mubr.bf16.gmra.mrb[0].mxu0 %v145
    %v329 = vpop.f32.mrb[0].mxu0
    %v330 = vadd.f32 %v88, %v329
    %v331 = vpop.f32.mrb[0].mxu0
    %v332 = vadd.f32 %v92, %v331
    %v333 = vpop.f32.mrb[0].mxu0
    %v334 = vadd.f32 %v88, %v333
    %v335 = vpop.f32.mrb[0].mxu0
    %v336 = vadd.f32 %v92, %v335
    %337 = vmatprep.mubr.bf16.mxu0 0
    %338 = vmatmul.mubr.bf16.gmra.mrb[0].mxu0 %v148
    %v339 = vpop.f32.mrb[0].mxu0
    %v340 = vadd.f32 %v88, %v339
    %v341 = vpop.f32.mrb[0].mxu0
    %v342 = vadd.f32 %v92, %v341
    %v343 = vpop.f32.mrb[0].mxu0
    %v344 = vadd.f32 %v88, %v343
    %v345 = vpop.f32.mrb[0].mxu0
    %v346 = vadd.f32 %v92, %v345
    %347 = vmatprep.mubr.bf16.mxu0 0
    %348 = vmatmul.mubr.bf16.gmra.mrb[0].mxu0 %v151
    %v349 = vpop.f32.mrb[0].mxu0
    %v350 = vadd.f32 %v88, %v349
    %v351 = vpop.f32.mrb[0].mxu0
    %v352 = vadd.f32 %v92, %v351
    %v353 = vpop.f32.mrb[0].mxu0
    %v354 = vadd.f32 %v88, %v353
    %v355 = vpop.f32.mrb[0].mxu0
    %v356 = vadd.f32 %v92, %v355
    %357 = vmatprep.mubr.bf16.mxu0 0
    %358 = vmatmul.mubr.bf16.gmra.mrb[0].mxu0 %v154
    %v359 = vpop.f32.mrb[0].mxu0
    %v360 = vadd.f32 %v88, %v359
    %v361 = vpop.f32.mrb[0].mxu0
    %v362 = vadd.f32 %v92, %v361
    %v363 = vpop.f32.mrb[0].mxu0
    %v364 = vadd.f32 %v88, %v363
    %v365 = vpop.f32.mrb[0].mxu0
    %v366 = vadd.f32 %v92, %v365
    %367 = vmatprep.mubr.bf16.mxu0 0
    %368 = vmatmul.mubr.bf16.gmra.mrb[0].mxu0 %v157
    %v369 = vpop.f32.mrb[0].mxu0
    %v370 = vadd.f32 %v88, %v369
    %v371 = vpop.f32.mrb[0].mxu0
    %v372 = vadd.f32 %v92, %v371
    %v373 = vpop.f32.mrb[0].mxu0
    %v374 = vadd.f32 %v88, %v373
    %v375 = vpop.f32.mrb[0].mxu0
    %v376 = vadd.f32 %v92, %v375
    %377 = vmatprep.mubr.bf16.mxu0 0
    %378 = vmatmul.mubr.bf16.gmra.mrb[0].mxu0 %v160
    %v379 = vpop.f32.mrb[0].mxu0
    %v380 = vadd.f32 %v88, %v379
    %v381 = vpop.f32.mrb[0].mxu0
    %v382 = vadd.f32 %v92, %v381
    %v383 = vpop.f32.mrb[0].mxu0
    %v384 = vadd.f32 %v88, %v383
    %v385 = vpop.f32.mrb[0].mxu0
    %v386 = vadd.f32 %v92, %v385
    %387 = vdwg.mxu0
    %v388 = vmax.f32 %v197, 0.0
    %v389 = vmax.f32 %v199, 0.0
    %v390 = vmax.f32 %v310, 0.0
    %v391 = vmax.f32 %v312, 0.0
    %v392 = vmax.f32 %v201, 0.0
    %v393 = vmax.f32 %v203, 0.0
    %v394 = vmax.f32 %v314, 0.0
    %v395 = vmax.f32 %v316, 0.0
    %v396 = vmax.f32 %v207, 0.0
    %v397 = vmax.f32 %v209, 0.0
    %v398 = vmax.f32 %v320, 0.0
    %v399 = vmax.f32 %v322, 0.0
    %v400 = vmax.f32 %v211, 0.0
    %v401 = vmax.f32 %v213, 0.0
    %v402 = vmax.f32 %v324, 0.0
    %v403 = vmax.f32 %v326, 0.0
    %v404 = vmax.f32 %v217, 0.0
    %v405 = vmax.f32 %v219, 0.0
    %v406 = vmax.f32 %v330, 0.0
    %v407 = vmax.f32 %v332, 0.0
    %v408 = vmax.f32 %v221, 0.0
    %v409 = vmax.f32 %v223, 0.0
    %v410 = vmax.f32 %v334, 0.0
    %v411 = vmax.f32 %v336, 0.0
    %v412 = vmax.f32 %v227, 0.0
    %v413 = vmax.f32 %v229, 0.0
    %v414 = vmax.f32 %v340, 0.0
    %v415 = vmax.f32 %v342, 0.0
    %v416 = vmax.f32 %v231, 0.0
    %v417 = vmax.f32 %v233, 0.0
    %v418 = vmax.f32 %v344, 0.0
    %v419 = vmax.f32 %v346, 0.0
    %v420 = vmax.f32 %v237, 0.0
    %v421 = vmax.f32 %v239, 0.0
    %v422 = vmax.f32 %v350, 0.0
    %v423 = vmax.f32 %v352, 0.0
    %v424 = vmax.f32 %v241, 0.0
    %v425 = vmax.f32 %v243, 0.0
    %v426 = vmax.f32 %v354, 0.0
    %v427 = vmax.f32 %v356, 0.0
    %v428 = vmax.f32 %v247, 0.0
    %v429 = vmax.f32 %v249, 0.0
    %v430 = vmax.f32 %v360, 0.0
    %v431 = vmax.f32 %v362, 0.0
    %v432 = vmax.f32 %v251, 0.0
    %v433 = vmax.f32 %v253, 0.0
    %v434 = vmax.f32 %v364, 0.0
    %v435 = vmax.f32 %v366, 0.0
    %v436 = vmax.f32 %v257, 0.0
    %v437 = vmax.f32 %v259, 0.0
    %v438 = vmax.f32 %v370, 0.0
    %v439 = vmax.f32 %v372, 0.0
    %v440 = vmax.f32 %v261, 0.0
    %v441 = vmax.f32 %v263, 0.0
    %v442 = vmax.f32 %v374, 0.0
    %v443 = vmax.f32 %v376, 0.0
    %v444 = vmax.f32 %v267, 0.0
    %v445 = vmax.f32 %v269, 0.0
    %v446 = vmax.f32 %v380, 0.0
    %v447 = vmax.f32 %v382, 0.0
    %v448 = vmax.f32 %v271, 0.0
    %v449 = vmax.f32 %v273, 0.0
    %v450 = vmax.f32 %v384, 0.0
    %v451 = vmax.f32 %v386, 0.0
    %v452 = vpack.c.bf16 %v392, %v388
    %v453 = vpack.c.bf16 %v393, %v389
    %v454 = vpack.c.bf16 %v394, %v390
    %v455 = vpack.c.bf16 %v395, %v391
    %v456 = vpack.c.bf16 %v400, %v396
    %v457 = vpack.c.bf16 %v401, %v397
    %v458 = vpack.c.bf16 %v402, %v398
    %v459 = vpack.c.bf16 %v403, %v399
    %v460 = vpack.c.bf16 %v408, %v404
    %v461 = vpack.c.bf16 %v409, %v405
    %v462 = vpack.c.bf16 %v410, %v406
    %v463 = vpack.c.bf16 %v411, %v407
    %v464 = vpack.c.bf16 %v416, %v412
    %v465 = vpack.c.bf16 %v417, %v413
    %v466 = vpack.c.bf16 %v418, %v414
    %v467 = vpack.c.bf16 %v419, %v415
    %v468 = vpack.c.bf16 %v424, %v420
    %v469 = vpack.c.bf16 %v425, %v421
    %v470 = vpack.c.bf16 %v426, %v422
    %v471 = vpack.c.bf16 %v427, %v423
    %v472 = vpack.c.bf16 %v432, %v428
    %v473 = vpack.c.bf16 %v433, %v429
    %v474 = vpack.c.bf16 %v434, %v430
    %v475 = vpack.c.bf16 %v435, %v431
    %v476 = vpack.c.bf16 %v440, %v436
    %v477 = vpack.c.bf16 %v441, %v437
    %v478 = vpack.c.bf16 %v442, %v438
    %v479 = vpack.c.bf16 %v443, %v439
    %v480 = vpack.c.bf16 %v448, %v444
    %v481 = vpack.c.bf16 %v449, %v445
    %v482 = vpack.c.bf16 %v450, %v446
    %v483 = vpack.c.bf16 %v451, %v447
    %v484 = vld [vmem:[#allocation3] sm:$0xff]
    %v485 = vld [vmem:[#allocation3 + $0x8] sm:$0xff]
    %v486 = vld [vmem:[#allocation3 + $0x10] sm:$0xff]
    %v487 = vld [vmem:[#allocation3 + $0x18] sm:$0xff]
    %v488 = vld [vmem:[#allocation3 + $0x20] sm:$0xff]
    %v489 = vld [vmem:[#allocation3 + $0x28] sm:$0xff]
    %v490 = vld [vmem:[#allocation3 + $0x30] sm:$0xff]
    %v491 = vld [vmem:[#allocation3 + $0x38] sm:$0xff]
    %v492 = vld [vmem:[#allocation3 + $0x40] sm:$0xff]
    %v493 = vld [vmem:[#allocation3 + $0x48] sm:$0xff]
    %v494 = vld [vmem:[#allocation3 + $0x50] sm:$0xff]
    %v495 = vld [vmem:[#allocation3 + $0x58] sm:$0xff]
    %v496 = vld [vmem:[#allocation3 + $0x60] sm:$0xff]
    %v497 = vld [vmem:[#allocation3 + $0x68] sm:$0xff]
    %v498 = vld [vmem:[#allocation3 + $0x70] sm:$0xff]
    %v499 = vld [vmem:[#allocation3 + $0x78] sm:$0xff]
    %v500 = vld [vmem:[#allocation3 + $0x80] sm:$0xff]
    %v501 = vld [vmem:[#allocation3 + $0x88] sm:$0xff]
    %v502 = vld [vmem:[#allocation3 + $0x90] sm:$0xff]
    %v503 = vld [vmem:[#allocation3 + $0x98] sm:$0xff]
    %v504 = vld [vmem:[#allocation3 + $0xa0] sm:$0xff]
    %v505 = vld [vmem:[#allocation3 + $0xa8] sm:$0xff]
    %v506 = vld [vmem:[#allocation3 + $0xb0] sm:$0xff]
    %v507 = vld [vmem:[#allocation3 + $0xb8] sm:$0xff]
    %v508 = vld [vmem:[#allocation3 + $0xc0] sm:$0xff]
    %v509 = vld [vmem:[#allocation3 + $0xc8] sm:$0xff]
    %v510 = vld [vmem:[#allocation3 + $0xd0] sm:$0xff]
    %v511 = vld [vmem:[#allocation3 + $0xd8] sm:$0xff]
    %v512 = vld [vmem:[#allocation3 + $0xe0] sm:$0xff]
    %v513 = vld [vmem:[#allocation3 + $0xe8] sm:$0xff]
    %v514 = vld [vmem:[#allocation3 + $0xf0] sm:$0xff]
    %v515 = vld [vmem:[#allocation3 + $0xf8] sm:$0xff]
    %v516 = vld [vmem:[#allocation3 + $0x100] sm:$0xff]
    %v517 = vld [vmem:[#allocation3 + $0x108] sm:$0xff]
    %v518 = vld [vmem:[#allocation3 + $0x110] sm:$0xff]
    %v519 = vld [vmem:[#allocation3 + $0x118] sm:$0xff]
    %v520 = vld [vmem:[#allocation3 + $0x120] sm:$0xff]
    %v521 = vld [vmem:[#allocation3 + $0x128] sm:$0xff]
    %v522 = vld [vmem:[#allocation3 + $0x130] sm:$0xff]
    %v523 = vld [vmem:[#allocation3 + $0x138] sm:$0xff]
    %v524 = vld [vmem:[#allocation3 + $0x140] sm:$0xff]
    %v525 = vld [vmem:[#allocation3 + $0x148] sm:$0xff]
    %v526 = vld [vmem:[#allocation3 + $0x150] sm:$0xff]
    %v527 = vld [vmem:[#allocation3 + $0x158] sm:$0xff]
    %v528 = vld [vmem:[#allocation3 + $0x160] sm:$0xff]
    %v529 = vld [vmem:[#allocation3 + $0x168] sm:$0xff]
    %v530 = vld [vmem:[#allocation3 + $0x170] sm:$0xff]
    %v531 = vld [vmem:[#allocation3 + $0x178] sm:$0xff]
    %v532 = vld [vmem:[#allocation3 + $0x180] sm:$0xff]
    %v533 = vld [vmem:[#allocation3 + $0x188] sm:$0xff]
    %v534 = vld [vmem:[#allocation3 + $0x190] sm:$0xff]
    %v535 = vld [vmem:[#allocation3 + $0x198] sm:$0xff]
    %v536 = vld [vmem:[#allocation3 + $0x1a0] sm:$0xff]
    %v537 = vld [vmem:[#allocation3 + $0x1a8] sm:$0xff]
    %v538 = vld [vmem:[#allocation3 + $0x1b0] sm:$0xff]
    %v539 = vld [vmem:[#allocation3 + $0x1b8] sm:$0xff]
    %v540 = vld [vmem:[#allocation3 + $0x1c0] sm:$0xff]
    %v541 = vld [vmem:[#allocation3 + $0x1c8] sm:$0xff]
    %v542 = vld [vmem:[#allocation3 + $0x1d0] sm:$0xff]
    %v543 = vld [vmem:[#allocation3 + $0x1d8] sm:$0xff]
    %v544 = vld [vmem:[#allocation3 + $0x1e0] sm:$0xff]
    %v545 = vld [vmem:[#allocation3 + $0x1e8] sm:$0xff]
    %v546 = vld [vmem:[#allocation3 + $0x1f0] sm:$0xff]
    %v547 = vld [vmem:[#allocation3 + $0x1f8] sm:$0xff]
    %v548 = vld [vmem:[%s4] sm:$0x3]
    %v550 = vlaneseq
    %v551 = vshrl.u32 %v550, 7
    %v552 = vsub.s32 0, %v551
    %v553 = vrot.slane %v548, %v552
    %v554 = vlaneseq
    %v555 = vshrl.u32 %v554, 7
    %v556 = vsub.s32 1, %v555
    %v557 = vrot.slane %v548, %v556
    %v624 = vunpack.c.l.b16 %v484
    %v625 = vunpack.c.h.b16 %v484
    %v626 = vunpack.c.l.b16 %v485
    %v627 = vunpack.c.h.b16 %v485
    %v628 = vunpack.c.l.b16 %v486
    %v629 = vunpack.c.h.b16 %v486
    %v630 = vunpack.c.l.b16 %v487
    %v631 = vunpack.c.h.b16 %v487
    %v632 = vunpack.c.l.b16 %v488
    %v633 = vunpack.c.h.b16 %v488
    %v634 = vunpack.c.l.b16 %v489
    %v635 = vunpack.c.h.b16 %v489
    %v636 = vunpack.c.l.b16 %v490
    %v637 = vunpack.c.h.b16 %v490
    %v638 = vunpack.c.l.b16 %v491
    %v639 = vunpack.c.h.b16 %v491
    %v640 = vunpack.c.l.b16 %v492
    %v641 = vunpack.c.h.b16 %v492
    %v642 = vunpack.c.l.b16 %v493
    %v643 = vunpack.c.h.b16 %v493
    %v644 = vunpack.c.l.b16 %v494
    %v645 = vunpack.c.h.b16 %v494
    %v646 = vunpack.c.l.b16 %v495
    %v647 = vunpack.c.h.b16 %v495
    %v648 = vunpack.c.l.b16 %v496
    %v649 = vunpack.c.h.b16 %v496
    %v650 = vunpack.c.l.b16 %v497
    %v651 = vunpack.c.h.b16 %v497
    %v652 = vunpack.c.l.b16 %v498
    %v653 = vunpack.c.h.b16 %v498
    %v654 = vunpack.c.l.b16 %v499
    %v655 = vunpack.c.h.b16 %v499
    %v656 = vunpack.c.l.b16 %v500
    %v657 = vunpack.c.h.b16 %v500
    %v658 = vunpack.c.l.b16 %v501
    %v659 = vunpack.c.h.b16 %v501
    %v660 = vunpack.c.l.b16 %v502
    %v661 = vunpack.c.h.b16 %v502
    %v662 = vunpack.c.l.b16 %v503
    %v663 = vunpack.c.h.b16 %v503
    %v664 = vunpack.c.l.b16 %v504
    %v665 = vunpack.c.h.b16 %v504
    %v666 = vunpack.c.l.b16 %v505
    %v667 = vunpack.c.h.b16 %v505
    %v668 = vunpack.c.l.b16 %v506
    %v669 = vunpack.c.h.b16 %v506
    %v670 = vunpack.c.l.b16 %v507
    %v671 = vunpack.c.h.b16 %v507
    %v672 = vunpack.c.l.b16 %v508
    %v673 = vunpack.c.h.b16 %v508
    %v674 = vunpack.c.l.b16 %v509
    %v675 = vunpack.c.h.b16 %v509
    %v676 = vunpack.c.l.b16 %v510
    %v677 = vunpack.c.h.b16 %v510
    %v678 = vunpack.c.l.b16 %v511
    %v679 = vunpack.c.h.b16 %v511
    %v680 = vunpack.c.l.b16 %v512
    %v681 = vunpack.c.h.b16 %v512
    %v682 = vunpack.c.l.b16 %v513
    %v683 = vunpack.c.h.b16 %v513
    %v684 = vunpack.c.l.b16 %v514
    %v685 = vunpack.c.h.b16 %v514
    %v686 = vunpack.c.l.b16 %v515
    %v687 = vunpack.c.h.b16 %v515
    %v688 = vunpack.c.l.b16 %v516
    %v689 = vunpack.c.h.b16 %v516
    %v690 = vunpack.c.l.b16 %v517
    %v691 = vunpack.c.h.b16 %v517
    %v692 = vunpack.c.l.b16 %v518
    %v693 = vunpack.c.h.b16 %v518
    %v694 = vunpack.c.l.b16 %v519
    %v695 = vunpack.c.h.b16 %v519
    %v696 = vunpack.c.l.b16 %v520
    %v697 = vunpack.c.h.b16 %v520
    %v698 = vunpack.c.l.b16 %v521
    %v699 = vunpack.c.h.b16 %v521
    %v700 = vunpack.c.l.b16 %v522
    %v701 = vunpack.c.h.b16 %v522
    %v702 = vunpack.c.l.b16 %v523
    %v703 = vunpack.c.h.b16 %v523
    %v704 = vunpack.c.l.b16 %v524
    %v705 = vunpack.c.h.b16 %v524
    %v706 = vunpack.c.l.b16 %v525
    %v707 = vunpack.c.h.b16 %v525
    %v708 = vunpack.c.l.b16 %v526
    %v709 = vunpack.c.h.b16 %v526
    %v710 = vunpack.c.l.b16 %v527
    %v711 = vunpack.c.h.b16 %v527
    %v712 = vunpack.c.l.b16 %v528
    %v713 = vunpack.c.h.b16 %v528
    %v714 = vunpack.c.l.b16 %v529
    %v715 = vunpack.c.h.b16 %v529
    %v716 = vunpack.c.l.b16 %v530
    %v717 = vunpack.c.h.b16 %v530
    %v718 = vunpack.c.l.b16 %v531
    %v719 = vunpack.c.h.b16 %v531
    %v720 = vunpack.c.l.b16 %v532
    %v721 = vunpack.c.h.b16 %v532
    %v722 = vunpack.c.l.b16 %v533
    %v723 = vunpack.c.h.b16 %v533
    %v724 = vunpack.c.l.b16 %v534
    %v725 = vunpack.c.h.b16 %v534
    %v726 = vunpack.c.l.b16 %v535
    %v727 = vunpack.c.h.b16 %v535
    %v728 = vunpack.c.l.b16 %v536
    %v729 = vunpack.c.h.b16 %v536
    %v730 = vunpack.c.l.b16 %v537
    %v731 = vunpack.c.h.b16 %v537
    %v732 = vunpack.c.l.b16 %v538
    %v733 = vunpack.c.h.b16 %v538
    %v734 = vunpack.c.l.b16 %v539
    %v735 = vunpack.c.h.b16 %v539
    %v736 = vunpack.c.l.b16 %v540
    %v737 = vunpack.c.h.b16 %v540
    %v738 = vunpack.c.l.b16 %v541
    %v739 = vunpack.c.h.b16 %v541
    %v740 = vunpack.c.l.b16 %v542
    %v741 = vunpack.c.h.b16 %v542
    %v742 = vunpack.c.l.b16 %v543
    %v743 = vunpack.c.h.b16 %v543
    %v744 = vunpack.c.l.b16 %v544
    %v745 = vunpack.c.h.b16 %v544
    %v746 = vunpack.c.l.b16 %v545
    %v747 = vunpack.c.h.b16 %v545
    %v748 = vunpack.c.l.b16 %v546
    %v749 = vunpack.c.h.b16 %v546
    %v750 = vunpack.c.l.b16 %v547
    %v751 = vunpack.c.h.b16 %v547
    %v752 = vpack.c.b16 %v626, %v624
    %v753 = vpack.c.b16 %v627, %v625
    %v754 = vpack.c.b16 %v630, %v628
    %v755 = vpack.c.b16 %v631, %v629
    %v756 = vpack.c.b16 %v634, %v632
    %v757 = vpack.c.b16 %v635, %v633
    %v758 = vpack.c.b16 %v638, %v636
    %v759 = vpack.c.b16 %v639, %v637
    %v760 = vpack.c.b16 %v642, %v640
    %v761 = vpack.c.b16 %v643, %v641
    %v762 = vpack.c.b16 %v646, %v644
    %v763 = vpack.c.b16 %v647, %v645
    %v764 = vpack.c.b16 %v650, %v648
    %v765 = vpack.c.b16 %v651, %v649
    %v766 = vpack.c.b16 %v654, %v652
    %v767 = vpack.c.b16 %v655, %v653
    %v768 = vpack.c.b16 %v658, %v656
    %v769 = vpack.c.b16 %v659, %v657
    %v770 = vpack.c.b16 %v662, %v660
    %v771 = vpack.c.b16 %v663, %v661
    %v772 = vpack.c.b16 %v666, %v664
    %v773 = vpack.c.b16 %v667, %v665
    %v774 = vpack.c.b16 %v670, %v668
    %v775 = vpack.c.b16 %v671, %v669
    %v776 = vpack.c.b16 %v674, %v672
    %v777 = vpack.c.b16 %v675, %v673
    %v778 = vpack.c.b16 %v678, %v676
    %v779 = vpack.c.b16 %v679, %v677
    %v780 = vpack.c.b16 %v682, %v680
    %v781 = vpack.c.b16 %v683, %v681
    %v782 = vpack.c.b16 %v686, %v684
    %v783 = vpack.c.b16 %v687, %v685
    %v784 = vpack.c.b16 %v690, %v688
    %v785 = vpack.c.b16 %v691, %v689
    %v786 = vpack.c.b16 %v694, %v692
    %v787 = vpack.c.b16 %v695, %v693
    %v788 = vpack.c.b16 %v698, %v696
    %v789 = vpack.c.b16 %v699, %v697
    %v790 = vpack.c.b16 %v702, %v700
    %v791 = vpack.c.b16 %v703, %v701
    %v792 = vpack.c.b16 %v706, %v704
    %v793 = vpack.c.b16 %v707, %v705
    %v794 = vpack.c.b16 %v710, %v708
    %v795 = vpack.c.b16 %v711, %v709
    %v796 = vpack.c.b16 %v714, %v712
    %v797 = vpack.c.b16 %v715, %v713
    %v798 = vpack.c.b16 %v718, %v716
    %v799 = vpack.c.b16 %v719, %v717
    %v800 = vpack.c.b16 %v722, %v720
    %v801 = vpack.c.b16 %v723, %v721
    %v802 = vpack.c.b16 %v726, %v724
    %v803 = vpack.c.b16 %v727, %v725
    %v804 = vpack.c.b16 %v730, %v728
    %v805 = vpack.c.b16 %v731, %v729
    %v806 = vpack.c.b16 %v734, %v732
    %v807 = vpack.c.b16 %v735, %v733
    %v808 = vpack.c.b16 %v738, %v736
    %v809 = vpack.c.b16 %v739, %v737
    %v810 = vpack.c.b16 %v742, %v740
    %v811 = vpack.c.b16 %v743, %v741
    %v812 = vpack.c.b16 %v746, %v744
    %v813 = vpack.c.b16 %v747, %v745
    %v814 = vpack.c.b16 %v750, %v748
    %v815 = vpack.c.b16 %v751, %v749
    %880 = vmatprep.subr.bf16.mxu0 %v753
    %881 = vmatpush1.bf16.msra.mxu0 %v752
    %882 = vmatprep.subr.bf16.mxu0 %v755
    %883 = vmatpush1.bf16.msra.mxu0 %v754
    %884 = vmatprep.subr.bf16.mxu0 %v757
    %885 = vmatpush1.bf16.msra.mxu0 %v756
    %886 = vmatprep.subr.bf16.mxu0 %v759
    %887 = vmatpush1.bf16.msra.mxu0 %v758
    %888 = vmatprep.subr.bf16.mxu0 %v761
    %889 = vmatpush1.bf16.msra.mxu0 %v760
    %890 = vmatprep.subr.bf16.mxu0 %v763
    %891 = vmatpush1.bf16.msra.mxu0 %v762
    %892 = vmatprep.subr.bf16.mxu0 %v765
    %893 = vmatpush1.bf16.msra.mxu0 %v764
    %894 = vmatprep.subr.bf16.mxu0 %v767
    %895 = vmatpush1.bf16.msra.mxu0 %v766
    %896 = vmatprep.subr.bf16.mxu0 %v769
    %897 = vmatpush1.bf16.msra.mxu0 %v768
    %898 = vmatprep.subr.bf16.mxu0 %v771
    %899 = vmatpush1.bf16.msra.mxu0 %v770
    %900 = vmatprep.subr.bf16.mxu0 %v773
    %901 = vmatpush1.bf16.msra.mxu0 %v772
    %902 = vmatprep.subr.bf16.mxu0 %v775
    %903 = vmatpush1.bf16.msra.mxu0 %v774
    %904 = vmatprep.subr.bf16.mxu0 %v777
    %905 = vmatpush1.bf16.msra.mxu0 %v776
    %906 = vmatprep.subr.bf16.mxu0 %v779
    %907 = vmatpush1.bf16.msra.mxu0 %v778
    %908 = vmatprep.subr.bf16.mxu0 %v781
    %909 = vmatpush1.bf16.msra.mxu0 %v780
    %910 = vmatprep.subr.bf16.mxu0 %v783
    %911 = vmatpush1.bf16.msra.mxu0 %v782
    %912 = vmatprep.mubr.bf16.mxu0 %v453
    %913 = vmatmul.mubr.bf16.gmra.mrb[0].mxu0 %v452
    %v914 = vpop.f32.mrb[0].mxu0
    %v915 = vadd.f32 %v553, %v914
    %v916 = vpop.f32.mrb[0].mxu0
    %v917 = vadd.f32 %v557, %v916
    %v918 = vpop.f32.mrb[0].mxu0
    %v919 = vadd.f32 %v553, %v918
    %v920 = vpop.f32.mrb[0].mxu0
    %v921 = vadd.f32 %v557, %v920
    %922 = vmatprep.mubr.bf16.mxu0 %v457
    %923 = vmatmul.mubr.bf16.gmra.mrb[0].mxu0 %v456
    %v924 = vpop.f32.mrb[0].mxu0
    %v925 = vadd.f32 %v553, %v924
    %v926 = vpop.f32.mrb[0].mxu0
    %v927 = vadd.f32 %v557, %v926
    %v928 = vpop.f32.mrb[0].mxu0
    %v929 = vadd.f32 %v553, %v928
    %v930 = vpop.f32.mrb[0].mxu0
    %v931 = vadd.f32 %v557, %v930
    %932 = vmatprep.mubr.bf16.mxu0 %v461
    %933 = vmatmul.mubr.bf16.gmra.mrb[0].mxu0 %v460
    %v934 = vpop.f32.mrb[0].mxu0
    %v935 = vadd.f32 %v553, %v934
    %v936 = vpop.f32.mrb[0].mxu0
    %v937 = vadd.f32 %v557, %v936
    %v938 = vpop.f32.mrb[0].mxu0
    %v939 = vadd.f32 %v553, %v938
    %v940 = vpop.f32.mrb[0].mxu0
    %v941 = vadd.f32 %v557, %v940
    %942 = vmatprep.mubr.bf16.mxu0 %v465
    %943 = vmatmul.mubr.bf16.gmra.mrb[0].mxu0 %v464
    %v944 = vpop.f32.mrb[0].mxu0
    %v945 = vadd.f32 %v553, %v944
    %v946 = vpop.f32.mrb[0].mxu0
    %v947 = vadd.f32 %v557, %v946
    %v948 = vpop.f32.mrb[0].mxu0
    %v949 = vadd.f32 %v553, %v948
    %v950 = vpop.f32.mrb[0].mxu0
    %v951 = vadd.f32 %v557, %v950
    %952 = vmatprep.mubr.bf16.mxu0 %v469
    %953 = vmatmul.mubr.bf16.gmra.mrb[0].mxu0 %v468
    %v954 = vpop.f32.mrb[0].mxu0
    %v955 = vadd.f32 %v553, %v954
    %v956 = vpop.f32.mrb[0].mxu0
    %v957 = vadd.f32 %v557, %v956
    %v958 = vpop.f32.mrb[0].mxu0
    %v959 = vadd.f32 %v553, %v958
    %v960 = vpop.f32.mrb[0].mxu0
    %v961 = vadd.f32 %v557, %v960
    %962 = vmatprep.mubr.bf16.mxu0 %v473
    %963 = vmatmul.mubr.bf16.gmra.mrb[0].mxu0 %v472
    %v964 = vpop.f32.mrb[0].mxu0
    %v965 = vadd.f32 %v553, %v964
    %v966 = vpop.f32.mrb[0].mxu0
    %v967 = vadd.f32 %v557, %v966
    %v968 = vpop.f32.mrb[0].mxu0
    %v969 = vadd.f32 %v553, %v968
    %v970 = vpop.f32.mrb[0].mxu0
    %v971 = vadd.f32 %v557, %v970
    %972 = vmatprep.mubr.bf16.mxu0 %v477
    %973 = vmatmul.mubr.bf16.gmra.mrb[0].mxu0 %v476
    %v974 = vpop.f32.mrb[0].mxu0
    %v975 = vadd.f32 %v553, %v974
    %v976 = vpop.f32.mrb[0].mxu0
    %v977 = vadd.f32 %v557, %v976
    %v978 = vpop.f32.mrb[0].mxu0
    %v979 = vadd.f32 %v553, %v978
    %v980 = vpop.f32.mrb[0].mxu0
    %v981 = vadd.f32 %v557, %v980
    %982 = vmatprep.mubr.bf16.mxu0 %v481
    %983 = vmatmul.mubr.bf16.gmra.mrb[0].mxu0 %v480
    %v984 = vpop.f32.mrb[0].mxu0
    %v985 = vadd.f32 %v553, %v984
    %v986 = vpop.f32.mrb[0].mxu0
    %v987 = vadd.f32 %v557, %v986
    %v988 = vpop.f32.mrb[0].mxu0
    %v989 = vadd.f32 %v553, %v988
    %v990 = vpop.f32.mrb[0].mxu0
    %v991 = vadd.f32 %v557, %v990
    %992 = vdwg.mxu0
    %993 = vmatprep.subr.bf16.mxu0 %v785
    %994 = vmatpush1.bf16.msra.mxu0 %v784
    %995 = vmatprep.subr.bf16.mxu0 %v787
    %996 = vmatpush1.bf16.msra.mxu0 %v786
    %997 = vmatprep.subr.bf16.mxu0 %v789
    %998 = vmatpush1.bf16.msra.mxu0 %v788
    %999 = vmatprep.subr.bf16.mxu0 %v791
    %1000 = vmatpush1.bf16.msra.mxu0 %v790
    %1001 = vmatprep.subr.bf16.mxu0 %v793
    %1002 = vmatpush1.bf16.msra.mxu0 %v792
    %1003 = vmatprep.subr.bf16.mxu0 %v795
    %1004 = vmatpush1.bf16.msra.mxu0 %v794
    %1005 = vmatprep.subr.bf16.mxu0 %v797
    %1006 = vmatpush1.bf16.msra.mxu0 %v796
    %1007 = vmatprep.subr.bf16.mxu0 %v799
    %1008 = vmatpush1.bf16.msra.mxu0 %v798
    %1009 = vmatprep.subr.bf16.mxu0 %v801
    %1010 = vmatpush1.bf16.msra.mxu0 %v800
    %1011 = vmatprep.subr.bf16.mxu0 %v803
    %1012 = vmatpush1.bf16.msra.mxu0 %v802
    %1013 = vmatprep.subr.bf16.mxu0 %v805
    %1014 = vmatpush1.bf16.msra.mxu0 %v804
    %1015 = vmatprep.subr.bf16.mxu0 %v807
    %1016 = vmatpush1.bf16.msra.mxu0 %v806
    %1017 = vmatprep.subr.bf16.mxu0 %v809
    %1018 = vmatpush1.bf16.msra.mxu0 %v808
    %1019 = vmatprep.subr.bf16.mxu0 %v811
    %1020 = vmatpush1.bf16.msra.mxu0 %v810
    %1021 = vmatprep.subr.bf16.mxu0 %v813
    %1022 = vmatpush1.bf16.msra.mxu0 %v812
    %1023 = vmatprep.subr.bf16.mxu0 %v815
    %1024 = vmatpush1.bf16.msra.mxu0 %v814
    %1025 = vmatprep.mubr.bf16.mxu0 %v455
    %1026 = vmatmul.mubr.bf16.gmra.mrb[0].mxu0 %v454
    %v1027 = vpop.f32.mrb[0].mxu0
    %v1028 = vadd.f32 %v915, %v1027
    %v1029 = vpop.f32.mrb[0].mxu0
    %v1030 = vadd.f32 %v917, %v1029
    %v1031 = vpop.f32.mrb[0].mxu0
    %v1032 = vadd.f32 %v919, %v1031
    %v1033 = vpop.f32.mrb[0].mxu0
    %v1034 = vadd.f32 %v921, %v1033
    %1035 = vmatprep.mubr.bf16.mxu0 %v459
    %1036 = vmatmul.mubr.bf16.gmra.mrb[0].mxu0 %v458
    %v1037 = vpop.f32.mrb[0].mxu0
    %v1038 = vadd.f32 %v925, %v1037
    %v1039 = vpop.f32.mrb[0].mxu0
    %v1040 = vadd.f32 %v927, %v1039
    %v1041 = vpop.f32.mrb[0].mxu0
    %v1042 = vadd.f32 %v929, %v1041
    %v1043 = vpop.f32.mrb[0].mxu0
    %v1044 = vadd.f32 %v931, %v1043
    %1045 = vmatprep.mubr.bf16.mxu0 %v463
    %1046 = vmatmul.mubr.bf16.gmra.mrb[0].mxu0 %v462
    %v1047 = vpop.f32.mrb[0].mxu0
    %v1048 = vadd.f32 %v935, %v1047
    %v1049 = vpop.f32.mrb[0].mxu0
    %v1050 = vadd.f32 %v937, %v1049
    %v1051 = vpop.f32.mrb[0].mxu0
    %v1052 = vadd.f32 %v939, %v1051
    %v1053 = vpop.f32.mrb[0].mxu0
    %v1054 = vadd.f32 %v941, %v1053
    %1055 = vmatprep.mubr.bf16.mxu0 %v467
    %1056 = vmatmul.mubr.bf16.gmra.mrb[0].mxu0 %v466
    %v1057 = vpop.f32.mrb[0].mxu0
    %v1058 = vadd.f32 %v945, %v1057
    %v1059 = vpop.f32.mrb[0].mxu0
    %v1060 = vadd.f32 %v947, %v1059
    %v1061 = vpop.f32.mrb[0].mxu0
    %v1062 = vadd.f32 %v949, %v1061
    %v1063 = vpop.f32.mrb[0].mxu0
    %v1064 = vadd.f32 %v951, %v1063
    %1065 = vmatprep.mubr.bf16.mxu0 %v471
    %1066 = vmatmul.mubr.bf16.gmra.mrb[0].mxu0 %v470
    %v1067 = vpop.f32.mrb[0].mxu0
    %v1068 = vadd.f32 %v955, %v1067
    %v1069 = vpop.f32.mrb[0].mxu0
    %v1070 = vadd.f32 %v957, %v1069
    %v1071 = vpop.f32.mrb[0].mxu0
    %v1072 = vadd.f32 %v959, %v1071
    %v1073 = vpop.f32.mrb[0].mxu0
    %v1074 = vadd.f32 %v961, %v1073
    %1075 = vmatprep.mubr.bf16.mxu0 %v475
    %1076 = vmatmul.mubr.bf16.gmra.mrb[0].mxu0 %v474
    %v1077 = vpop.f32.mrb[0].mxu0
    %v1078 = vadd.f32 %v965, %v1077
    %v1079 = vpop.f32.mrb[0].mxu0
    %v1080 = vadd.f32 %v967, %v1079
    %v1081 = vpop.f32.mrb[0].mxu0
    %v1082 = vadd.f32 %v969, %v1081
    %v1083 = vpop.f32.mrb[0].mxu0
    %v1084 = vadd.f32 %v971, %v1083
    %1085 = vmatprep.mubr.bf16.mxu0 %v479
    %1086 = vmatmul.mubr.bf16.gmra.mrb[0].mxu0 %v478
    %v1087 = vpop.f32.mrb[0].mxu0
    %v1088 = vadd.f32 %v975, %v1087
    %v1089 = vpop.f32.mrb[0].mxu0
    %v1090 = vadd.f32 %v977, %v1089
    %v1091 = vpop.f32.mrb[0].mxu0
    %v1092 = vadd.f32 %v979, %v1091
    %v1093 = vpop.f32.mrb[0].mxu0
    %v1094 = vadd.f32 %v981, %v1093
    %1095 = vmatprep.mubr.bf16.mxu0 %v483
    %1096 = vmatmul.mubr.bf16.gmra.mrb[0].mxu0 %v482
    %v1097 = vpop.f32.mrb[0].mxu0
    %v1098 = vadd.f32 %v985, %v1097
    %v1099 = vpop.f32.mrb[0].mxu0
    %v1100 = vadd.f32 %v987, %v1099
    %v1101 = vpop.f32.mrb[0].mxu0
    %v1102 = vadd.f32 %v989, %v1101
    %v1103 = vpop.f32.mrb[0].mxu0
    %v1104 = vadd.f32 %v991, %v1103
    %1105 = vdwg.mxu0
    %v1106 = vmax.f32 %v1028, 0.0
    %v1107 = vmax.f32 %v1030, 0.0
    %v1108 = vmax.f32 %v1032, 0.0
    %v1109 = vmax.f32 %v1034, 0.0
    %v1110 = vmax.f32 %v1038, 0.0
    %v1111 = vmax.f32 %v1040, 0.0
    %v1112 = vmax.f32 %v1042, 0.0
    %v1113 = vmax.f32 %v1044, 0.0
    %v1114 = vmax.f32 %v1048, 0.0
    %v1115 = vmax.f32 %v1050, 0.0
    %v1116 = vmax.f32 %v1052, 0.0
    %v1117 = vmax.f32 %v1054, 0.0
    %v1118 = vmax.f32 %v1058, 0.0
    %v1119 = vmax.f32 %v1060, 0.0
    %v1120 = vmax.f32 %v1062, 0.0
    %v1121 = vmax.f32 %v1064, 0.0
    %v1122 = vmax.f32 %v1068, 0.0
    %v1123 = vmax.f32 %v1070, 0.0
    %v1124 = vmax.f32 %v1072, 0.0
    %v1125 = vmax.f32 %v1074, 0.0
    %v1126 = vmax.f32 %v1078, 0.0
    %v1127 = vmax.f32 %v1080, 0.0
    %v1128 = vmax.f32 %v1082, 0.0
    %v1129 = vmax.f32 %v1084, 0.0
    %v1130 = vmax.f32 %v1088, 0.0
    %v1131 = vmax.f32 %v1090, 0.0
    %v1132 = vmax.f32 %v1092, 0.0
    %v1133 = vmax.f32 %v1094, 0.0
    %v1134 = vmax.f32 %v1098, 0.0
    %v1135 = vmax.f32 %v1100, 0.0
    %v1136 = vmax.f32 %v1102, 0.0
    %v1137 = vmax.f32 %v1104, 0.0
    %v1138 = vld [vmem:[%s5] sm:$0x3]
    %v1140 = vlaneseq
    %v1141 = vshrl.u32 %v1140, 7
    %v1142 = vsub.s32 0, %v1141
    %v1143 = vrot.slane %v1138, %v1142
    %v1144 = vlaneseq
    %v1145 = vshrl.u32 %v1144, 7
    %v1146 = vsub.s32 1, %v1145
    %v1147 = vrot.slane %v1138, %v1146
    %v1150 = vmul.f32 %v1106, %v1143
    %v1151 = vmul.f32 %v1107, %v1147
    %v1152 = vmul.f32 %v1108, %v1143
    %v1153 = vmul.f32 %v1109, %v1147
    %v1154 = vmul.f32 %v1110, %v1143
    %v1155 = vmul.f32 %v1111, %v1147
    %v1156 = vmul.f32 %v1112, %v1143
    %v1157 = vmul.f32 %v1113, %v1147
    %v1158 = vmul.f32 %v1114, %v1143
    %v1159 = vmul.f32 %v1115, %v1147
    %v1160 = vmul.f32 %v1116, %v1143
    %v1161 = vmul.f32 %v1117, %v1147
    %v1162 = vmul.f32 %v1118, %v1143
    %v1163 = vmul.f32 %v1119, %v1147
    %v1164 = vmul.f32 %v1120, %v1143
    %v1165 = vmul.f32 %v1121, %v1147
    %v1166 = vmul.f32 %v1122, %v1143
    %v1167 = vmul.f32 %v1123, %v1147
    %v1168 = vmul.f32 %v1124, %v1143
    %v1169 = vmul.f32 %v1125, %v1147
    %v1170 = vmul.f32 %v1126, %v1143
    %v1171 = vmul.f32 %v1127, %v1147
    %v1172 = vmul.f32 %v1128, %v1143
    %v1173 = vmul.f32 %v1129, %v1147
    %v1174 = vmul.f32 %v1130, %v1143
    %v1175 = vmul.f32 %v1131, %v1147
    %v1176 = vmul.f32 %v1132, %v1143
    %v1177 = vmul.f32 %v1133, %v1147
    %v1178 = vmul.f32 %v1134, %v1143
    %v1179 = vmul.f32 %v1135, %v1147
    %v1180 = vmul.f32 %v1136, %v1143
    %v1181 = vmul.f32 %v1137, %v1147
    %v1182 = vadd.f32 %v1150, %v1151
    %1183 = vadd.xlane.f32.xlu0 %v1182
    %v1184 = vpop.xlane.xlu0 %1183
    %v1185 = vadd.f32 %v1152, %v1153
    %1186 = vadd.xlane.f32.xlu0 %v1185
    %v1187 = vpop.xlane.xlu0 %1186
    %v1188 = vadd.f32 %v1154, %v1155
    %1189 = vadd.xlane.f32.xlu0 %v1188
    %v1190 = vpop.xlane.xlu0 %1189
    %v1191 = vadd.f32 %v1156, %v1157
    %1192 = vadd.xlane.f32.xlu0 %v1191
    %v1193 = vpop.xlane.xlu0 %1192
    %v1194 = vadd.f32 %v1158, %v1159
    %1195 = vadd.xlane.f32.xlu0 %v1194
    %v1196 = vpop.xlane.xlu0 %1195
    %v1197 = vadd.f32 %v1160, %v1161
    %1198 = vadd.xlane.f32.xlu0 %v1197
    %v1199 = vpop.xlane.xlu0 %1198
    %v1200 = vadd.f32 %v1162, %v1163
    %1201 = vadd.xlane.f32.xlu0 %v1200
    %v1202 = vpop.xlane.xlu0 %1201
    %v1203 = vadd.f32 %v1164, %v1165
    %1204 = vadd.xlane.f32.xlu0 %v1203
    %v1205 = vpop.xlane.xlu0 %1204
    %v1206 = vadd.f32 %v1166, %v1167
    %1207 = vadd.xlane.f32.xlu0 %v1206
    %v1208 = vpop.xlane.xlu0 %1207
    %v1209 = vadd.f32 %v1168, %v1169
    %1210 = vadd.xlane.f32.xlu0 %v1209
    %v1211 = vpop.xlane.xlu0 %1210
    %v1212 = vadd.f32 %v1170, %v1171
    %1213 = vadd.xlane.f32.xlu0 %v1212
    %v1214 = vpop.xlane.xlu0 %1213
    %v1215 = vadd.f32 %v1172, %v1173
    %1216 = vadd.xlane.f32.xlu0 %v1215
    %v1217 = vpop.xlane.xlu0 %1216
    %v1218 = vadd.f32 %v1174, %v1175
    %1219 = vadd.xlane.f32.xlu0 %v1218
    %v1220 = vpop.xlane.xlu0 %1219
    %v1221 = vadd.f32 %v1176, %v1177
    %1222 = vadd.xlane.f32.xlu0 %v1221
    %v1223 = vpop.xlane.xlu0 %1222
    %v1224 = vadd.f32 %v1178, %v1179
    %1225 = vadd.xlane.f32.xlu0 %v1224
    %v1226 = vpop.xlane.xlu0 %1225
    %v1227 = vadd.f32 %v1180, %v1181
    %1228 = vadd.xlane.f32.xlu0 %v1227
    %v1229 = vpop.xlane.xlu0 %1228
    %s1230 = sld [smem:[#allocation2]]
    %v1231 = vstv %s1230
    %v1232 = vadd.f32 %v1184, %v1231
    %v1233 = vadd.f32 %v1187, %v1231
    %v1234 = vadd.f32 %v1190, %v1231
    %v1235 = vadd.f32 %v1193, %v1231
    %v1236 = vadd.f32 %v1196, %v1231
    %v1237 = vadd.f32 %v1199, %v1231
    %v1238 = vadd.f32 %v1202, %v1231
    %v1239 = vadd.f32 %v1205, %v1231
    %v1240 = vadd.f32 %v1208, %v1231
    %v1241 = vadd.f32 %v1211, %v1231
    %v1242 = vadd.f32 %v1214, %v1231
    %v1243 = vadd.f32 %v1217, %v1231
    %v1244 = vadd.f32 %v1220, %v1231
    %v1245 = vadd.f32 %v1223, %v1231
    %v1246 = vadd.f32 %v1226, %v1231
    %v1247 = vadd.f32 %v1229, %v1231
    %v1264 = vlaneseq
    %v1265 = vand.u32 %v1264, 127
    %v1266 = vlaneseq
    %v1267 = vshrl.u32 %v1266, 7
    %v1268 = vsub.s32 %v1265, %v1267
    %v1269 = vrot.slane %v1232, %v1268
    %v1270 = vadd.s32 %v1265, 4294967288
    %v1271 = vlaneseq
    %v1272 = vshrl.u32 %v1271, 7
    %v1273 = vsub.s32 %v1270, %v1272
    %v1274 = vrot.slane %v1233, %v1273
    %vm1275 = vcmask 130112
    %v1276 = vsel %vm1275, %v1274, %v1269
    %v1277 = vadd.s32 %v1265, 4294967280
    %v1278 = vlaneseq
    %v1279 = vshrl.u32 %v1278, 7
    %v1280 = vsub.s32 %v1277, %v1279
    %v1281 = vrot.slane %v1234, %v1280
    %vm1282 = vcmask 195712
    %v1283 = vsel %vm1282, %v1281, %v1276
    %v1284 = vadd.s32 %v1265, 4294967272
    %v1285 = vlaneseq
    %v1286 = vshrl.u32 %v1285, 7
    %v1287 = vsub.s32 %v1284, %v1286
    %v1288 = vrot.slane %v1235, %v1287
    %vm1289 = vcmask 261312
    %v1290 = vsel %vm1289, %v1288, %v1283
    %v1291 = vadd.s32 %v1265, 4294967264
    %v1292 = vlaneseq
    %v1293 = vshrl.u32 %v1292, 7
    %v1294 = vsub.s32 %v1291, %v1293
    %v1295 = vrot.slane %v1236, %v1294
    %vm1296 = vcmask 326912
    %v1297 = vsel %vm1296, %v1295, %v1290
    %v1298 = vadd.s32 %v1265, 4294967256
    %v1299 = vlaneseq
    %v1300 = vshrl.u32 %v1299, 7
    %v1301 = vsub.s32 %v1298, %v1300
    %v1302 = vrot.slane %v1237, %v1301
    %vm1303 = vcmask 392512
    %v1304 = vsel %vm1303, %v1302, %v1297
    %v1305 = vadd.s32 %v1265, 4294967248
    %v1306 = vlaneseq
    %v1307 = vshrl.u32 %v1306, 7
    %v1308 = vsub.s32 %v1305, %v1307
    %v1309 = vrot.slane %v1238, %v1308
    %vm1310 = vcmask 458112
    %v1311 = vsel %vm1310, %v1309, %v1304
    %v1312 = vadd.s32 %v1265, 4294967240
    %v1313 = vlaneseq
    %v1314 = vshrl.u32 %v1313, 7
    %v1315 = vsub.s32 %v1312, %v1314
    %v1316 = vrot.slane %v1239, %v1315
    %vm1317 = vcmask 523712
    %v1318 = vsel %vm1317, %v1316, %v1311
    %v1319 = vadd.s32 %v1265, 4294967232
    %v1320 = vlaneseq
    %v1321 = vshrl.u32 %v1320, 7
    %v1322 = vsub.s32 %v1319, %v1321
    %v1323 = vrot.slane %v1240, %v1322
    %vm1324 = vcmask 589312
    %v1325 = vsel %vm1324, %v1323, %v1318
    %v1326 = vadd.s32 %v1265, 4294967224
    %v1327 = vlaneseq
    %v1328 = vshrl.u32 %v1327, 7
    %v1329 = vsub.s32 %v1326, %v1328
    %v1330 = vrot.slane %v1241, %v1329
    %vm1331 = vcmask 654912
    %v1332 = vsel %vm1331, %v1330, %v1325
    %v1333 = vadd.s32 %v1265, 4294967216
    %v1334 = vlaneseq
    %v1335 = vshrl.u32 %v1334, 7
    %v1336 = vsub.s32 %v1333, %v1335
    %v1337 = vrot.slane %v1242, %v1336
    %vm1338 = vcmask 720512
    %v1339 = vsel %vm1338, %v1337, %v1332
    %v1340 = vadd.s32 %v1265, 4294967208
    %v1341 = vlaneseq
    %v1342 = vshrl.u32 %v1341, 7
    %v1343 = vsub.s32 %v1340, %v1342
    %v1344 = vrot.slane %v1243, %v1343
    %vm1345 = vcmask 786112
    %v1346 = vsel %vm1345, %v1344, %v1339
    %v1347 = vadd.s32 %v1265, 4294967200
    %v1348 = vlaneseq
    %v1349 = vshrl.u32 %v1348, 7
    %v1350 = vsub.s32 %v1347, %v1349
    %v1351 = vrot.slane %v1244, %v1350
    %vm1352 = vcmask 851712
    %v1353 = vsel %vm1352, %v1351, %v1346
    %v1354 = vadd.s32 %v1265, 4294967192
    %v1355 = vlaneseq
    %v1356 = vshrl.u32 %v1355, 7
    %v1357 = vsub.s32 %v1354, %v1356
    %v1358 = vrot.slane %v1245, %v1357
    %vm1359 = vcmask 917312
    %v1360 = vsel %vm1359, %v1358, %v1353
    %v1361 = vadd.s32 %v1265, 4294967184
    %v1362 = vlaneseq
    %v1363 = vshrl.u32 %v1362, 7
    %v1364 = vsub.s32 %v1361, %v1363
    %v1365 = vrot.slane %v1246, %v1364
    %vm1366 = vcmask 982912
    %v1367 = vsel %vm1366, %v1365, %v1360
    %v1368 = vadd.s32 %v1265, 4294967176
    %v1369 = vlaneseq
    %v1370 = vshrl.u32 %v1369, 7
    %v1371 = vsub.s32 %v1368, %v1370
    %v1372 = vrot.slane %v1247, %v1371
    %vm1373 = vcmask 1048512
    %v1374 = vsel %vm1373, %v1372, %v1367
    %1376 = vst [vmem:[#allocation6] sm:$0x1] %v1374
    // Predicated region
    $region34: #{tpu_custom_call.1} parent=1 // pred_check
      _
    $region35: #{tpu_custom_call.1} parent=1 // pred_check_branch
      %1378 = sbr.rel (0) target = $region37
    $region36: #{tpu_custom_call.1} parent=1 // pred_region
      %s1380 = ssub.s32 16, 16
      %1381 = vsyncadd [#allocation5], %s1380
      %s1383 = sshll.u32 [#allocation6], 4
      %s1384 = int_to_ptr.vmem [resolvable:$true] %s1383
      %1386 = dma.vmem_to_hbm [thread:$0]  %s1384, 16, %s7, [#allocation5]
    $region37: #{tpu_custom_call.1} parent=1 // pred_fallthru
      _
    // Predicated region
    $region38: #{tpu_custom_call.1} parent=1 // pred_check
      _
    $region39: #{tpu_custom_call.1} parent=1 // pred_check_branch
      %1388 = sbr.rel (0) target = $region41
    $region40: #{tpu_custom_call.1} parent=1 // pred_region
      %1389 = dma.done [#allocation5], 16
    $region41: #{tpu_custom_call.1} parent=1 // pred_fallthru
      _
    %1390 = vsyncpa [#allocation4], 1
    %1391 = vsyncpa [#allocation5], 1

// kernel: tpu_custom_call.1
$region0: #{tpu_custom_call.1}
  #allocation0 [shape = 'u32[]', space=smem, size = 0x4, offset = 0x4, fixed_abs, tag = 'smem constant byte address 0x4 - core index']
  #allocation1 [shape = 'u32[144,128]{1,0:T(1,128)}', space=vmem, size = 0x12000, scoped, tag = 'internal scratch']
  #allocation2 [shape = 'f32[1]{0:T(128)S(6)}', space=smem, size = 0x200, scoped, tag = 'scoped memory for tpu_custom_call.1']
  %s0 = inlined_call_operand.vmem [shape: f32[128,32], index: 0, kind: input, shape index: {}]
  %s1 = inlined_call_operand.vmem [shape: bf16[32,512], index: 1, kind: input, shape index: {}]
  %s2 = inlined_call_operand.vmem [shape: f32[1,512], index: 2, kind: input, shape index: {}]
  %s3 = inlined_call_operand.hbm [shape: bf16[512,256], index: 3, kind: input, shape index: {}]
  %s4 = inlined_call_operand.vmem [shape: f32[1,256], index: 4, kind: input, shape index: {}]
  %s5 = inlined_call_operand.vmem [shape: f32[1,256], index: 5, kind: input, shape index: {}]
  %s6 = inlined_call_operand.<no memory space> [shape: f32[1], index: 6, kind: input, shape index: {}]
  %s7 = inlined_call_operand.hbm [shape: f32[1,1,128], index: 7, kind: output, shape index: {}]
  %s8 = sld [smem:[#allocation0]]
  $region42: #{tpu_custom_call.1} parent=0
    _
  %s10 = ssub.s32 1, %s8
  %s11 = scalar_select 0, %s10, %s8
  %12 = sst [smem:[#allocation2]] %s6
  $region1: #{tpu_custom_call.1} parent=0
    #allocation3 [shape = 'u8[262144]{0}', space=vmem, size = 0x40000, scoped, tag = 'input window, operand 3, single buffered']
    #allocation4 [shape = 's32[1]{0}', space=sflag, size = 0x4, scoped, tag = 'scoped memory for tpu_custom_call.1']
    #allocation5 [shape = 's32[1]{0}', space=sflag, size = 0x4, scoped, tag = 'scoped memory for tpu_custom_call.1']
    #allocation6 [shape = 'u8[512]{0}', space=vmem, size = 0x400, scoped, tag = 'output window, operand 0, single buffered']
    %13 = vsyncpa [#allocation4], 0
    %14 = vsyncpa [#allocation5], 0
    // Predicated region
    $region2: #{tpu_custom_call.1} parent=1 // pred_check
      _
    $region3: #{tpu_custom_call.1} parent=1 // pred_check_branch
      %16 = sbr.rel (0) target = $region5
    $region4: #{tpu_custom_call.1} parent=1 // pred_region
      _
    $region5: #{tpu_custom_call.1} parent=1 // pred_fallthru
      _
    // Predicated region
    $region6: #{tpu_custom_call.1} parent=1 // pred_check
      _
    $region7: #{tpu_custom_call.1} parent=1 // pred_check_branch
      %18 = sbr.rel (0) target = $region9
    $region8: #{tpu_custom_call.1} parent=1 // pred_region
      _
    $region9: #{tpu_custom_call.1} parent=1 // pred_fallthru
      _
    // Predicated region
    $region10: #{tpu_custom_call.1} parent=1 // pred_check
      _
    $region11: #{tpu_custom_call.1} parent=1 // pred_check_branch
      %20 = sbr.rel (0) target = $region13
    $region12: #{tpu_custom_call.1} parent=1 // pred_region
      _
    $region13: #{tpu_custom_call.1} parent=1 // pred_fallthru
      _
    // Predicated region
    $region14: #{tpu_custom_call.1} parent=1 // pred_check
      _
    $region15: #{tpu_custom_call.1} parent=1 // pred_check_branch
      %22 = sbr.rel (0) target = $region17
    $region16: #{tpu_custom_call.1} parent=1 // pred_region
      %s24 = ssub.s32 8192, 8192
      %25 = vsyncadd [#allocation4], %s24
      %s26 = sshll.u32 [#allocation3], 4
      %s27 = int_to_ptr.vmem [resolvable:$true] %s26
      %32 = dma.hbm_to_vmem [thread:$0]  %s3, 8192, %s27, [#allocation4], 128, 128, 8
    $region17: #{tpu_custom_call.1} parent=1 // pred_fallthru
      _
    // Predicated region
    $region18: #{tpu_custom_call.1} parent=1 // pred_check
      _
    $region19: #{tpu_custom_call.1} parent=1 // pred_check_branch
      %34 = sbr.rel (0) target = $region21
    $region20: #{tpu_custom_call.1} parent=1 // pred_region
      _
    $region21: #{tpu_custom_call.1} parent=1 // pred_fallthru
      _
    // Predicated region
    $region22: #{tpu_custom_call.1} parent=1 // pred_check
      _
    $region23: #{tpu_custom_call.1} parent=1 // pred_check_branch
      %36 = sbr.rel (0) target = $region25
    $region24: #{tpu_custom_call.1} parent=1 // pred_region
      _
    $region25: #{tpu_custom_call.1} parent=1 // pred_fallthru
      _
    // Predicated region
    $region26: #{tpu_custom_call.1} parent=1 // pred_check
      _
    $region27: #{tpu_custom_call.1} parent=1 // pred_check_branch
      %38 = sbr.rel (0) target = $region29
    $region28: #{tpu_custom_call.1} parent=1 // pred_region
      _
    $region29: #{tpu_custom_call.1} parent=1 // pred_fallthru
      _
    // Predicated region
    $region30: #{tpu_custom_call.1} parent=1 // pred_check
      _
    $region31: #{tpu_custom_call.1} parent=1 // pred_check_branch
      %40 = sbr.rel (0) target = $region33
    $region32: #{tpu_custom_call.1} parent=1 // pred_region
      %41 = dma.done [#allocation4], 8192
    $region33: #{tpu_custom_call.1} parent=1 // pred_fallthru
      _
    %v43 = vld [vmem:[%s0] sm:$0xff]
    %v44 = vld [vmem:[%s0 + $0x8] sm:$0xff]
    %v45 = vld [vmem:[%s0 + $0x10] sm:$0xff]
    %v46 = vld [vmem:[%s0 + $0x18] sm:$0xff]
    %v47 = vld [vmem:[%s0 + $0x20] sm:$0xff]
    %v48 = vld [vmem:[%s0 + $0x28] sm:$0xff]
    %v49 = vld [vmem:[%s0 + $0x30] sm:$0xff]
    %v50 = vld [vmem:[%s0 + $0x38] sm:$0xff]
    %v51 = vld [vmem:[%s0 + $0x40] sm:$0xff]
    %v52 = vld [vmem:[%s0 + $0x48] sm:$0xff]
    %v53 = vld [vmem:[%s0 + $0x50] sm:$0xff]
    %v54 = vld [vmem:[%s0 + $0x58] sm:$0xff]
    %v55 = vld [vmem:[%s0 + $0x60] sm:$0xff]
    %v56 = vld [vmem:[%s0 + $0x68] sm:$0xff]
    %v57 = vld [vmem:[%s0 + $0x70] sm:$0xff]
    %v58 = vld [vmem:[%s0 + $0x78] sm:$0xff]
    %v59 = vpack.c.bf16 %v44, %v43
    %v60 = vpack.c.bf16 %v46, %v45
    %v61 = vpack.c.bf16 %v48, %v47
    %v62 = vpack.c.bf16 %v50, %v49
    %v63 = vpack.c.bf16 %v52, %v51
    %v64 = vpack.c.bf16 %v54, %v53
    %v65 = vpack.c.bf16 %v56, %v55
    %v66 = vpack.c.bf16 %v58, %v57
    %v67 = vld [vmem:[%s1] sm:$0xff]
    %v68 = vld [vmem:[%s1 + $0x8] sm:$0xff]
    %v69 = vld [vmem:[%s1 + $0x10] sm:$0xff]
    %v70 = vld [vmem:[%s1 + $0x18] sm:$0xff]
    %v71 = vld [vmem:[%s1 + $0x20] sm:$0xff]
    %v72 = vld [vmem:[%s1 + $0x28] sm:$0xff]
    %v73 = vld [vmem:[%s1 + $0x30] sm:$0xff]
    %v74 = vld [vmem:[%s1 + $0x38] sm:$0xff]
    %v75 = vld [vmem:[%s2] sm:$0xf]
    %v77 = vlaneseq
    %v78 = vshrl.u32 %v77, 7
    %v79 = vsub.s32 0, %v78
    %v80 = vrot.slane %v75, %v79
    %v81 = vlaneseq
    %v82 = vshrl.u32 %v81, 7
    %v83 = vsub.s32 1, %v82
    %v84 = vrot.slane %v75, %v83
    %v85 = vlaneseq
    %v86 = vshrl.u32 %v85, 7
    %v87 = vsub.s32 2, %v86
    %v88 = vrot.slane %v75, %v87
    %v89 = vlaneseq
    %v90 = vshrl.u32 %v89, 7
    %v91 = vsub.s32 3, %v90
    %v92 = vrot.slane %v75, %v91
    %v105 = vunpack.c.l.b16 %v67
    %v106 = vunpack.c.h.b16 %v67
    %v107 = vunpack.c.l.b16 %v68
    %v108 = vunpack.c.h.b16 %v68
    %v109 = vunpack.c.l.b16 %v69
    %v110 = vunpack.c.h.b16 %v69
    %v111 = vunpack.c.l.b16 %v70
    %v112 = vunpack.c.h.b16 %v70
    %v113 = vunpack.c.l.b16 %v71
    %v114 = vunpack.c.h.b16 %v71
    %v115 = vunpack.c.l.b16 %v72
    %v116 = vunpack.c.h.b16 %v72
    %v117 = vunpack.c.l.b16 %v73
    %v118 = vunpack.c.h.b16 %v73
    %v119 = vunpack.c.l.b16 %v74
    %v120 = vunpack.c.h.b16 %v74
    %v121 = vpack.c.b16 %v109, %v105
    %v122 = vpack.c.b16 %v110, %v106
    %v123 = vpack.c.b16 %v111, %v107
    %v124 = vpack.c.b16 %v112, %v108
    %v125 = vpack.c.b16 %v117, %v113
    %v126 = vpack.c.b16 %v118, %v114
    %v127 = vpack.c.b16 %v119, %v115
    %v128 = vpack.c.b16 %v120, %v116
    %vm137 = vcmask 261120
    %v139 = vsel %vm137, %v59, 0
    %v142 = vsel %vm137, %v60, 0
    %v145 = vsel %vm137, %v61, 0
    %v148 = vsel %vm137, %v62, 0
    %v151 = vsel %vm137, %v63, 0
    %v154 = vsel %vm137, %v64, 0
    %v157 = vsel %vm137, %v65, 0
    %v160 = vsel %vm137, %v66, 0
    %162 = vmatprep.subr.bf16.mxu0 %v122
    %163 = vmatpush1.bf16.msra.mxu0 %v121
    %164 = vmatprep.subr.bf16.mxu0 %v126
    %165 = vmatpush1.bf16.msra.mxu0 %v125
    %166 = vmatprep.subr.bf16.mxu0 0
    %167 = vmatpush1.bf16.msra.mxu0 0
    %168 = vmatprep.subr.bf16.mxu0 0
    %169 = vmatpush1.bf16.msra.mxu0 0
    %170 = vmatprep.subr.bf16.mxu0 0
    %171 = vmatpush1.bf16.msra.mxu0 0
    %172 = vmatprep.subr.bf16.mxu0 0
    %173 = vmatpush1.bf16.msra.mxu0 0
    %174 = vmatprep.subr.bf16.mxu0 0
    %175 = vmatpush1.bf16.msra.mxu0 0
    %176 = vmatprep.subr.bf16.mxu0 0
    %177 = vmatpush1.bf16.msra.mxu0 0
    %178 = vmatprep.subr.bf16.mxu0 0
    %179 = vmatpush1.bf16.msra.mxu0 0
    %180 = vmatprep.subr.bf16.mxu0 0
    %181 = vmatpush1.bf16.msra.mxu0 0
    %182 = vmatprep.subr.bf16.mxu0 0
    %183 = vmatpush1.bf16.msra.mxu0 0
    %184 = vmatprep.subr.bf16.mxu0 0
    %185 = vmatpush1.bf16.msra.mxu0 0
    %186 = vmatprep.subr.bf16.mxu0 0
    %187 = vmatpush1.bf16.msra.mxu0 0
    %188 = vmatprep.subr.bf16.mxu0 0
    %189 = vmatpush1.bf16.msra.mxu0 0
    %190 = vmatprep.subr.bf16.mxu0 0
    %191 = vmatpush1.bf16.msra.mxu0 0
    %192 = vmatprep.subr.bf16.mxu0 0
    %193 = vmatpush1.bf16.msra.mxu0 0
    %194 = vmatprep.mubr.bf16.mxu0 0
    %195 = vmatmul.mubr.bf16.gmra.mrb[0].mxu0 %v139
    %v196 = vpop.f32.mrb[0].mxu0
    %v197 = vadd.f32 %v80, %v196
    %v198 = vpop.f32.mrb[0].mxu0
    %v199 = vadd.f32 %v84, %v198
    %v200 = vpop.f32.mrb[0].mxu0
    %v201 = vadd.f32 %v80, %v200
    %v202 = vpop.f32.mrb[0].mxu0
    %v203 = vadd.f32 %v84, %v202
    %204 = vmatprep.mubr.bf16.mxu0 0
    %205 = vmatmul.mubr.bf16.gmra.mrb[0].mxu0 %v142
    %v206 = vpop.f32.mrb[0].mxu0
    %v207 = vadd.f32 %v80, %v206
    %v208 = vpop.f32.mrb[0].mxu0
    %v209 = vadd.f32 %v84, %v208
    %v210 = vpop.f32.mrb[0].mxu0
    %v211 = vadd.f32 %v80, %v210
    %v212 = vpop.f32.mrb[0].mxu0
    %v213 = vadd.f32 %v84, %v212
    %214 = vmatprep.mubr.bf16.mxu0 0
    %215 = vmatmul.mubr.bf16.gmra.mrb[0].mxu0 %v145
    %v216 = vpop.f32.mrb[0].mxu0
    %v217 = vadd.f32 %v80, %v216
    %v218 = vpop.f32.mrb[0].mxu0
    %v219 = vadd.f32 %v84, %v218
    %v220 = vpop.f32.mrb[0].mxu0
    %v221 = vadd.f32 %v80, %v220
    %v222 = vpop.f32.mrb[0].mxu0
    %v223 = vadd.f32 %v84, %v222
    %224 = vmatprep.mubr.bf16.mxu0 0
    %225 = vmatmul.mubr.bf16.gmra.mrb[0].mxu0 %v148
    %v226 = vpop.f32.mrb[0].mxu0
    %v227 = vadd.f32 %v80, %v226
    %v228 = vpop.f32.mrb[0].mxu0
    %v229 = vadd.f32 %v84, %v228
    %v230 = vpop.f32.mrb[0].mxu0
    %v231 = vadd.f32 %v80, %v230
    %v232 = vpop.f32.mrb[0].mxu0
    %v233 = vadd.f32 %v84, %v232
    %234 = vmatprep.mubr.bf16.mxu0 0
    %235 = vmatmul.mubr.bf16.gmra.mrb[0].mxu0 %v151
    %v236 = vpop.f32.mrb[0].mxu0
    %v237 = vadd.f32 %v80, %v236
    %v238 = vpop.f32.mrb[0].mxu0
    %v239 = vadd.f32 %v84, %v238
    %v240 = vpop.f32.mrb[0].mxu0
    %v241 = vadd.f32 %v80, %v240
    %v242 = vpop.f32.mrb[0].mxu0
    %v243 = vadd.f32 %v84, %v242
    %244 = vmatprep.mubr.bf16.mxu0 0
    %245 = vmatmul.mubr.bf16.gmra.mrb[0].mxu0 %v154
    %v246 = vpop.f32.mrb[0].mxu0
    %v247 = vadd.f32 %v80, %v246
    %v248 = vpop.f32.mrb[0].mxu0
    %v249 = vadd.f32 %v84, %v248
    %v250 = vpop.f32.mrb[0].mxu0
    %v251 = vadd.f32 %v80, %v250
    %v252 = vpop.f32.mrb[0].mxu0
    %v253 = vadd.f32 %v84, %v252
    %254 = vmatprep.mubr.bf16.mxu0 0
    %255 = vmatmul.mubr.bf16.gmra.mrb[0].mxu0 %v157
    %v256 = vpop.f32.mrb[0].mxu0
    %v257 = vadd.f32 %v80, %v256
    %v258 = vpop.f32.mrb[0].mxu0
    %v259 = vadd.f32 %v84, %v258
    %v260 = vpop.f32.mrb[0].mxu0
    %v261 = vadd.f32 %v80, %v260
    %v262 = vpop.f32.mrb[0].mxu0
    %v263 = vadd.f32 %v84, %v262
    %264 = vmatprep.mubr.bf16.mxu0 0
    %265 = vmatmul.mubr.bf16.gmra.mrb[0].mxu0 %v160
    %v266 = vpop.f32.mrb[0].mxu0
    %v267 = vadd.f32 %v80, %v266
    %v268 = vpop.f32.mrb[0].mxu0
    %v269 = vadd.f32 %v84, %v268
    %v270 = vpop.f32.mrb[0].mxu0
    %v271 = vadd.f32 %v80, %v270
    %v272 = vpop.f32.mrb[0].mxu0
    %v273 = vadd.f32 %v84, %v272
    %274 = vdwg.mxu0
    %275 = vmatprep.subr.bf16.mxu0 %v124
    %276 = vmatpush1.bf16.msra.mxu0 %v123
    %277 = vmatprep.subr.bf16.mxu0 %v128
    %278 = vmatpush1.bf16.msra.mxu0 %v127
    %279 = vmatprep.subr.bf16.mxu0 0
    %280 = vmatpush1.bf16.msra.mxu0 0
    %281 = vmatprep.subr.bf16.mxu0 0
    %282 = vmatpush1.bf16.msra.mxu0 0
    %283 = vmatprep.subr.bf16.mxu0 0
    %284 = vmatpush1.bf16.msra.mxu0 0
    %285 = vmatprep.subr.bf16.mxu0 0
    %286 = vmatpush1.bf16.msra.mxu0 0
    %287 = vmatprep.subr.bf16.mxu0 0
    %288 = vmatpush1.bf16.msra.mxu0 0
    %289 = vmatprep.subr.bf16.mxu0 0
    %290 = vmatpush1.bf16.msra.mxu0 0
    %291 = vmatprep.subr.bf16.mxu0 0
    %292 = vmatpush1.bf16.msra.mxu0 0
    %293 = vmatprep.subr.bf16.mxu0 0
    %294 = vmatpush1.bf16.msra.mxu0 0
    %295 = vmatprep.subr.bf16.mxu0 0
    %296 = vmatpush1.bf16.msra.mxu0 0
    %297 = vmatprep.subr.bf16.mxu0 0
    %298 = vmatpush1.bf16.msra.mxu0 0
    %299 = vmatprep.subr.bf16.mxu0 0
    %300 = vmatpush1.bf16.msra.mxu0 0
    %301 = vmatprep.subr.bf16.mxu0 0
    %302 = vmatpush1.bf16.msra.mxu0 0
    %303 = vmatprep.subr.bf16.mxu0 0
    %304 = vmatpush1.bf16.msra.mxu0 0
    %305 = vmatprep.subr.bf16.mxu0 0
    %306 = vmatpush1.bf16.msra.mxu0 0
    %307 = vmatprep.mubr.bf16.mxu0 0
    %308 = vmatmul.mubr.bf16.gmra.mrb[0].mxu0 %v139
    %v309 = vpop.f32.mrb[0].mxu0
    %v310 = vadd.f32 %v88, %v309
    %v311 = vpop.f32.mrb[0].mxu0
    %v312 = vadd.f32 %v92, %v311
    %v313 = vpop.f32.mrb[0].mxu0
    %v314 = vadd.f32 %v88, %v313
    %v315 = vpop.f32.mrb[0].mxu0
    %v316 = vadd.f32 %v92, %v315
    %317 = vmatprep.mubr.bf16.mxu0 0
    %318 = vmatmul.mubr.bf16.gmra.mrb[0].mxu0 %v142
    %v319 = vpop.f32.mrb[0].mxu0
    %v320 = vadd.f32 %v88, %v319
    %v321 = vpop.f32.mrb[0].mxu0
    %v322 = vadd.f32 %v92, %v321
    %v323 = vpop.f32.mrb[0].mxu0
    %v324 = vadd.f32 %v88, %v323
    %v325 = vpop.f32.mrb[0].mxu0
    %v326 = vadd.f32 %v92, %v325
    %327 = vmatprep.mubr.bf16.mxu0 0
    %328 = vmatmul.mubr.bf16.gmra.mrb[0].mxu0 %v145
    %v329 = vpop.f32.mrb[0].mxu0
    %v330 = vadd.f32 %v88, %v329
    %v331 = vpop.f32.mrb[0].mxu0
    %v332 = vadd.f32 %v92, %v331
    %v333 = vpop.f32.mrb[0].mxu0
    %v334 = vadd.f32 %v88, %v333
    %v335 = vpop.f32.mrb[0].mxu0
    %v336 = vadd.f32 %v92, %v335
    %337 = vmatprep.mubr.bf16.mxu0 0
    %338 = vmatmul.mubr.bf16.gmra.mrb[0].mxu0 %v148
    %v339 = vpop.f32.mrb[0].mxu0
    %v340 = vadd.f32 %v88, %v339
    %v341 = vpop.f32.mrb[0].mxu0
    %v342 = vadd.f32 %v92, %v341
    %v343 = vpop.f32.mrb[0].mxu0
    %v344 = vadd.f32 %v88, %v343
    %v345 = vpop.f32.mrb[0].mxu0
    %v346 = vadd.f32 %v92, %v345
    %347 = vmatprep.mubr.bf16.mxu0 0
    %348 = vmatmul.mubr.bf16.gmra.mrb[0].mxu0 %v151
    %v349 = vpop.f32.mrb[0].mxu0
    %v350 = vadd.f32 %v88, %v349
    %v351 = vpop.f32.mrb[0].mxu0
    %v352 = vadd.f32 %v92, %v351
    %v353 = vpop.f32.mrb[0].mxu0
    %v354 = vadd.f32 %v88, %v353
    %v355 = vpop.f32.mrb[0].mxu0
    %v356 = vadd.f32 %v92, %v355
    %357 = vmatprep.mubr.bf16.mxu0 0
    %358 = vmatmul.mubr.bf16.gmra.mrb[0].mxu0 %v154
    %v359 = vpop.f32.mrb[0].mxu0
    %v360 = vadd.f32 %v88, %v359
    %v361 = vpop.f32.mrb[0].mxu0
    %v362 = vadd.f32 %v92, %v361
    %v363 = vpop.f32.mrb[0].mxu0
    %v364 = vadd.f32 %v88, %v363
    %v365 = vpop.f32.mrb[0].mxu0
    %v366 = vadd.f32 %v92, %v365
    %367 = vmatprep.mubr.bf16.mxu0 0
    %368 = vmatmul.mubr.bf16.gmra.mrb[0].mxu0 %v157
    %v369 = vpop.f32.mrb[0].mxu0
    %v370 = vadd.f32 %v88, %v369
    %v371 = vpop.f32.mrb[0].mxu0
    %v372 = vadd.f32 %v92, %v371
    %v373 = vpop.f32.mrb[0].mxu0
    %v374 = vadd.f32 %v88, %v373
    %v375 = vpop.f32.mrb[0].mxu0
    %v376 = vadd.f32 %v92, %v375
    %377 = vmatprep.mubr.bf16.mxu0 0
    %378 = vmatmul.mubr.bf16.gmra.mrb[0].mxu0 %v160
    %v379 = vpop.f32.mrb[0].mxu0
    %v380 = vadd.f32 %v88, %v379
    %v381 = vpop.f32.mrb[0].mxu0
    %v382 = vadd.f32 %v92, %v381
    %v383 = vpop.f32.mrb[0].mxu0
    %v384 = vadd.f32 %v88, %v383
    %v385 = vpop.f32.mrb[0].mxu0
    %v386 = vadd.f32 %v92, %v385
    %387 = vdwg.mxu0
    %v388 = vmax.f32 %v197, 0.0
    %v389 = vmax.f32 %v199, 0.0
    %v390 = vmax.f32 %v310, 0.0
    %v391 = vmax.f32 %v312, 0.0
    %v392 = vmax.f32 %v201, 0.0
    %v393 = vmax.f32 %v203, 0.0
    %v394 = vmax.f32 %v314, 0.0
    %v395 = vmax.f32 %v316, 0.0
    %v396 = vmax.f32 %v207, 0.0
    %v397 = vmax.f32 %v209, 0.0
    %v398 = vmax.f32 %v320, 0.0
    %v399 = vmax.f32 %v322, 0.0
    %v400 = vmax.f32 %v211, 0.0
    %v401 = vmax.f32 %v213, 0.0
    %v402 = vmax.f32 %v324, 0.0
    %v403 = vmax.f32 %v326, 0.0
    %v404 = vmax.f32 %v217, 0.0
    %v405 = vmax.f32 %v219, 0.0
    %v406 = vmax.f32 %v330, 0.0
    %v407 = vmax.f32 %v332, 0.0
    %v408 = vmax.f32 %v221, 0.0
    %v409 = vmax.f32 %v223, 0.0
    %v410 = vmax.f32 %v334, 0.0
    %v411 = vmax.f32 %v336, 0.0
    %v412 = vmax.f32 %v227, 0.0
    %v413 = vmax.f32 %v229, 0.0
    %v414 = vmax.f32 %v340, 0.0
    %v415 = vmax.f32 %v342, 0.0
    %v416 = vmax.f32 %v231, 0.0
    %v417 = vmax.f32 %v233, 0.0
    %v418 = vmax.f32 %v344, 0.0
    %v419 = vmax.f32 %v346, 0.0
    %v420 = vmax.f32 %v237, 0.0
    %v421 = vmax.f32 %v239, 0.0
    %v422 = vmax.f32 %v350, 0.0
    %v423 = vmax.f32 %v352, 0.0
    %v424 = vmax.f32 %v241, 0.0
    %v425 = vmax.f32 %v243, 0.0
    %v426 = vmax.f32 %v354, 0.0
    %v427 = vmax.f32 %v356, 0.0
    %v428 = vmax.f32 %v247, 0.0
    %v429 = vmax.f32 %v249, 0.0
    %v430 = vmax.f32 %v360, 0.0
    %v431 = vmax.f32 %v362, 0.0
    %v432 = vmax.f32 %v251, 0.0
    %v433 = vmax.f32 %v253, 0.0
    %v434 = vmax.f32 %v364, 0.0
    %v435 = vmax.f32 %v366, 0.0
    %v436 = vmax.f32 %v257, 0.0
    %v437 = vmax.f32 %v259, 0.0
    %v438 = vmax.f32 %v370, 0.0
    %v439 = vmax.f32 %v372, 0.0
    %v440 = vmax.f32 %v261, 0.0
    %v441 = vmax.f32 %v263, 0.0
    %v442 = vmax.f32 %v374, 0.0
    %v443 = vmax.f32 %v376, 0.0
    %v444 = vmax.f32 %v267, 0.0
    %v445 = vmax.f32 %v269, 0.0
    %v446 = vmax.f32 %v380, 0.0
    %v447 = vmax.f32 %v382, 0.0
    %v448 = vmax.f32 %v271, 0.0
    %v449 = vmax.f32 %v273, 0.0
    %v450 = vmax.f32 %v384, 0.0
    %v451 = vmax.f32 %v386, 0.0
    %v452 = vpack.c.bf16 %v392, %v388
    %v453 = vpack.c.bf16 %v393, %v389
    %v454 = vpack.c.bf16 %v394, %v390
    %v455 = vpack.c.bf16 %v395, %v391
    %v456 = vpack.c.bf16 %v400, %v396
    %v457 = vpack.c.bf16 %v401, %v397
    %v458 = vpack.c.bf16 %v402, %v398
    %v459 = vpack.c.bf16 %v403, %v399
    %v460 = vpack.c.bf16 %v408, %v404
    %v461 = vpack.c.bf16 %v409, %v405
    %v462 = vpack.c.bf16 %v410, %v406
    %v463 = vpack.c.bf16 %v411, %v407
    %v464 = vpack.c.bf16 %v416, %v412
    %v465 = vpack.c.bf16 %v417, %v413
    %v466 = vpack.c.bf16 %v418, %v414
    %v467 = vpack.c.bf16 %v419, %v415
    %v468 = vpack.c.bf16 %v424, %v420
    %v469 = vpack.c.bf16 %v425, %v421
    %v470 = vpack.c.bf16 %v426, %v422
    %v471 = vpack.c.bf16 %v427, %v423
    %v472 = vpack.c.bf16 %v432, %v428
    %v473 = vpack.c.bf16 %v433, %v429
    %v474 = vpack.c.bf16 %v434, %v430
    %v475 = vpack.c.bf16 %v435, %v431
    %v476 = vpack.c.bf16 %v440, %v436
    %v477 = vpack.c.bf16 %v441, %v437
    %v478 = vpack.c.bf16 %v442, %v438
    %v479 = vpack.c.bf16 %v443, %v439
    %v480 = vpack.c.bf16 %v448, %v444
    %v481 = vpack.c.bf16 %v449, %v445
    %v482 = vpack.c.bf16 %v450, %v446
    %v483 = vpack.c.bf16 %v451, %v447
    %v484 = vld [vmem:[#allocation3] sm:$0xff]
    %v485 = vld [vmem:[#allocation3 + $0x8] sm:$0xff]
    %v486 = vld [vmem:[#allocation3 + $0x10] sm:$0xff]
    %v487 = vld [vmem:[#allocation3 + $0x18] sm:$0xff]
    %v488 = vld [vmem:[#allocation3 + $0x20] sm:$0xff]
    %v489 = vld [vmem:[#allocation3 + $0x28] sm:$0xff]
    %v490 = vld [vmem:[#allocation3 + $0x30] sm:$0xff]
    %v491 = vld [vmem:[#allocation3 + $0x38] sm:$0xff]
    %v492 = vld [vmem:[#allocation3 + $0x40] sm:$0xff]
    %v493 = vld [vmem:[#allocation3 + $0x48] sm:$0xff]
    %v494 = vld [vmem:[#allocation3 + $0x50] sm:$0xff]
    %v495 = vld [vmem:[#allocation3 + $0x58] sm:$0xff]
    %v496 = vld [vmem:[#allocation3 + $0x60] sm:$0xff]
    %v497 = vld [vmem:[#allocation3 + $0x68] sm:$0xff]
    %v498 = vld [vmem:[#allocation3 + $0x70] sm:$0xff]
    %v499 = vld [vmem:[#allocation3 + $0x78] sm:$0xff]
    %v500 = vld [vmem:[#allocation3 + $0x80] sm:$0xff]
    %v501 = vld [vmem:[#allocation3 + $0x88] sm:$0xff]
    %v502 = vld [vmem:[#allocation3 + $0x90] sm:$0xff]
    %v503 = vld [vmem:[#allocation3 + $0x98] sm:$0xff]
    %v504 = vld [vmem:[#allocation3 + $0xa0] sm:$0xff]
    %v505 = vld [vmem:[#allocation3 + $0xa8] sm:$0xff]
    %v506 = vld [vmem:[#allocation3 + $0xb0] sm:$0xff]
    %v507 = vld [vmem:[#allocation3 + $0xb8] sm:$0xff]
    %v508 = vld [vmem:[#allocation3 + $0xc0] sm:$0xff]
    %v509 = vld [vmem:[#allocation3 + $0xc8] sm:$0xff]
    %v510 = vld [vmem:[#allocation3 + $0xd0] sm:$0xff]
    %v511 = vld [vmem:[#allocation3 + $0xd8] sm:$0xff]
    %v512 = vld [vmem:[#allocation3 + $0xe0] sm:$0xff]
    %v513 = vld [vmem:[#allocation3 + $0xe8] sm:$0xff]
    %v514 = vld [vmem:[#allocation3 + $0xf0] sm:$0xff]
    %v515 = vld [vmem:[#allocation3 + $0xf8] sm:$0xff]
    %v516 = vld [vmem:[#allocation3 + $0x100] sm:$0xff]
    %v517 = vld [vmem:[#allocation3 + $0x108] sm:$0xff]
    %v518 = vld [vmem:[#allocation3 + $0x110] sm:$0xff]
    %v519 = vld [vmem:[#allocation3 + $0x118] sm:$0xff]
    %v520 = vld [vmem:[#allocation3 + $0x120] sm:$0xff]
    %v521 = vld [vmem:[#allocation3 + $0x128] sm:$0xff]
    %v522 = vld [vmem:[#allocation3 + $0x130] sm:$0xff]
    %v523 = vld [vmem:[#allocation3 + $0x138] sm:$0xff]
    %v524 = vld [vmem:[#allocation3 + $0x140] sm:$0xff]
    %v525 = vld [vmem:[#allocation3 + $0x148] sm:$0xff]
    %v526 = vld [vmem:[#allocation3 + $0x150] sm:$0xff]
    %v527 = vld [vmem:[#allocation3 + $0x158] sm:$0xff]
    %v528 = vld [vmem:[#allocation3 + $0x160] sm:$0xff]
    %v529 = vld [vmem:[#allocation3 + $0x168] sm:$0xff]
    %v530 = vld [vmem:[#allocation3 + $0x170] sm:$0xff]
    %v531 = vld [vmem:[#allocation3 + $0x178] sm:$0xff]
    %v532 = vld [vmem:[#allocation3 + $0x180] sm:$0xff]
    %v533 = vld [vmem:[#allocation3 + $0x188] sm:$0xff]
    %v534 = vld [vmem:[#allocation3 + $0x190] sm:$0xff]
    %v535 = vld [vmem:[#allocation3 + $0x198] sm:$0xff]
    %v536 = vld [vmem:[#allocation3 + $0x1a0] sm:$0xff]
    %v537 = vld [vmem:[#allocation3 + $0x1a8] sm:$0xff]
    %v538 = vld [vmem:[#allocation3 + $0x1b0] sm:$0xff]
    %v539 = vld [vmem:[#allocation3 + $0x1b8] sm:$0xff]
    %v540 = vld [vmem:[#allocation3 + $0x1c0] sm:$0xff]
    %v541 = vld [vmem:[#allocation3 + $0x1c8] sm:$0xff]
    %v542 = vld [vmem:[#allocation3 + $0x1d0] sm:$0xff]
    %v543 = vld [vmem:[#allocation3 + $0x1d8] sm:$0xff]
    %v544 = vld [vmem:[#allocation3 + $0x1e0] sm:$0xff]
    %v545 = vld [vmem:[#allocation3 + $0x1e8] sm:$0xff]
    %v546 = vld [vmem:[#allocation3 + $0x1f0] sm:$0xff]
    %v547 = vld [vmem:[#allocation3 + $0x1f8] sm:$0xff]
    %v548 = vld [vmem:[%s4] sm:$0x3]
    %v550 = vlaneseq
    %v551 = vshrl.u32 %v550, 7
    %v552 = vsub.s32 0, %v551
    %v553 = vrot.slane %v548, %v552
    %v554 = vlaneseq
    %v555 = vshrl.u32 %v554, 7
    %v556 = vsub.s32 1, %v555
    %v557 = vrot.slane %v548, %v556
    %v624 = vunpack.c.l.b16 %v484
    %v625 = vunpack.c.h.b16 %v484
    %v626 = vunpack.c.l.b16 %v485
    %v627 = vunpack.c.h.b16 %v485
    %v628 = vunpack.c.l.b16 %v486
    %v629 = vunpack.c.h.b16 %v486
    %v630 = vunpack.c.l.b16 %v487
    %v631 = vunpack.c.h.b16 %v487
    %v632 = vunpack.c.l.b16 %v488
    %v633 = vunpack.c.h.b16 %v488
    %v634 = vunpack.c.l.b16 %v489
    %v635 = vunpack.c.h.b16 %v489
    %v636 = vunpack.c.l.b16 %v490
    %v637 = vunpack.c.h.b16 %v490
    %v638 = vunpack.c.l.b16 %v491
    %v639 = vunpack.c.h.b16 %v491
    %v640 = vunpack.c.l.b16 %v492
    %v641 = vunpack.c.h.b16 %v492
    %v642 = vunpack.c.l.b16 %v493
    %v643 = vunpack.c.h.b16 %v493
    %v644 = vunpack.c.l.b16 %v494
    %v645 = vunpack.c.h.b16 %v494
    %v646 = vunpack.c.l.b16 %v495
    %v647 = vunpack.c.h.b16 %v495
    %v648 = vunpack.c.l.b16 %v496
    %v649 = vunpack.c.h.b16 %v496
    %v650 = vunpack.c.l.b16 %v497
    %v651 = vunpack.c.h.b16 %v497
    %v652 = vunpack.c.l.b16 %v498
    %v653 = vunpack.c.h.b16 %v498
    %v654 = vunpack.c.l.b16 %v499
    %v655 = vunpack.c.h.b16 %v499
    %v656 = vunpack.c.l.b16 %v500
    %v657 = vunpack.c.h.b16 %v500
    %v658 = vunpack.c.l.b16 %v501
    %v659 = vunpack.c.h.b16 %v501
    %v660 = vunpack.c.l.b16 %v502
    %v661 = vunpack.c.h.b16 %v502
    %v662 = vunpack.c.l.b16 %v503
    %v663 = vunpack.c.h.b16 %v503
    %v664 = vunpack.c.l.b16 %v504
    %v665 = vunpack.c.h.b16 %v504
    %v666 = vunpack.c.l.b16 %v505
    %v667 = vunpack.c.h.b16 %v505
    %v668 = vunpack.c.l.b16 %v506
    %v669 = vunpack.c.h.b16 %v506
    %v670 = vunpack.c.l.b16 %v507
    %v671 = vunpack.c.h.b16 %v507
    %v672 = vunpack.c.l.b16 %v508
    %v673 = vunpack.c.h.b16 %v508
    %v674 = vunpack.c.l.b16 %v509
    %v675 = vunpack.c.h.b16 %v509
    %v676 = vunpack.c.l.b16 %v510
    %v677 = vunpack.c.h.b16 %v510
    %v678 = vunpack.c.l.b16 %v511
    %v679 = vunpack.c.h.b16 %v511
    %v680 = vunpack.c.l.b16 %v512
    %v681 = vunpack.c.h.b16 %v512
    %v682 = vunpack.c.l.b16 %v513
    %v683 = vunpack.c.h.b16 %v513
    %v684 = vunpack.c.l.b16 %v514
    %v685 = vunpack.c.h.b16 %v514
    %v686 = vunpack.c.l.b16 %v515
    %v687 = vunpack.c.h.b16 %v515
    %v688 = vunpack.c.l.b16 %v516
    %v689 = vunpack.c.h.b16 %v516
    %v690 = vunpack.c.l.b16 %v517
    %v691 = vunpack.c.h.b16 %v517
    %v692 = vunpack.c.l.b16 %v518
    %v693 = vunpack.c.h.b16 %v518
    %v694 = vunpack.c.l.b16 %v519
    %v695 = vunpack.c.h.b16 %v519
    %v696 = vunpack.c.l.b16 %v520
    %v697 = vunpack.c.h.b16 %v520
    %v698 = vunpack.c.l.b16 %v521
    %v699 = vunpack.c.h.b16 %v521
    %v700 = vunpack.c.l.b16 %v522
    %v701 = vunpack.c.h.b16 %v522
    %v702 = vunpack.c.l.b16 %v523
    %v703 = vunpack.c.h.b16 %v523
    %v704 = vunpack.c.l.b16 %v524
    %v705 = vunpack.c.h.b16 %v524
    %v706 = vunpack.c.l.b16 %v525
    %v707 = vunpack.c.h.b16 %v525
    %v708 = vunpack.c.l.b16 %v526
    %v709 = vunpack.c.h.b16 %v526
    %v710 = vunpack.c.l.b16 %v527
    %v711 = vunpack.c.h.b16 %v527
    %v712 = vunpack.c.l.b16 %v528
    %v713 = vunpack.c.h.b16 %v528
    %v714 = vunpack.c.l.b16 %v529
    %v715 = vunpack.c.h.b16 %v529
    %v716 = vunpack.c.l.b16 %v530
    %v717 = vunpack.c.h.b16 %v530
    %v718 = vunpack.c.l.b16 %v531
    %v719 = vunpack.c.h.b16 %v531
    %v720 = vunpack.c.l.b16 %v532
    %v721 = vunpack.c.h.b16 %v532
    %v722 = vunpack.c.l.b16 %v533
    %v723 = vunpack.c.h.b16 %v533
    %v724 = vunpack.c.l.b16 %v534
    %v725 = vunpack.c.h.b16 %v534
    %v726 = vunpack.c.l.b16 %v535
    %v727 = vunpack.c.h.b16 %v535
    %v728 = vunpack.c.l.b16 %v536
    %v729 = vunpack.c.h.b16 %v536
    %v730 = vunpack.c.l.b16 %v537
    %v731 = vunpack.c.h.b16 %v537
    %v732 = vunpack.c.l.b16 %v538
    %v733 = vunpack.c.h.b16 %v538
    %v734 = vunpack.c.l.b16 %v539
    %v735 = vunpack.c.h.b16 %v539
    %v736 = vunpack.c.l.b16 %v540
    %v737 = vunpack.c.h.b16 %v540
    %v738 = vunpack.c.l.b16 %v541
    %v739 = vunpack.c.h.b16 %v541
    %v740 = vunpack.c.l.b16 %v542
    %v741 = vunpack.c.h.b16 %v542
    %v742 = vunpack.c.l.b16 %v543
    %v743 = vunpack.c.h.b16 %v543
    %v744 = vunpack.c.l.b16 %v544
    %v745 = vunpack.c.h.b16 %v544
    %v746 = vunpack.c.l.b16 %v545
    %v747 = vunpack.c.h.b16 %v545
    %v748 = vunpack.c.l.b16 %v546
    %v749 = vunpack.c.h.b16 %v546
    %v750 = vunpack.c.l.b16 %v547
    %v751 = vunpack.c.h.b16 %v547
    %v752 = vpack.c.b16 %v626, %v624
    %v753 = vpack.c.b16 %v627, %v625
    %v754 = vpack.c.b16 %v630, %v628
    %v755 = vpack.c.b16 %v631, %v629
    %v756 = vpack.c.b16 %v634, %v632
    %v757 = vpack.c.b16 %v635, %v633
    %v758 = vpack.c.b16 %v638, %v636
    %v759 = vpack.c.b16 %v639, %v637
    %v760 = vpack.c.b16 %v642, %v640
    %v761 = vpack.c.b16 %v643, %v641
    %v762 = vpack.c.b16 %v646, %v644
    %v763 = vpack.c.b16 %v647, %v645
    %v764 = vpack.c.b16 %v650, %v648
    %v765 = vpack.c.b16 %v651, %v649
    %v766 = vpack.c.b16 %v654, %v652
    %v767 = vpack.c.b16 %v655, %v653
    %v768 = vpack.c.b16 %v658, %v656
    %v769 = vpack.c.b16 %v659, %v657
    %v770 = vpack.c.b16 %v662, %v660
    %v771 = vpack.c.b16 %v663, %v661
    %v772 = vpack.c.b16 %v666, %v664
    %v773 = vpack.c.b16 %v667, %v665
    %v774 = vpack.c.b16 %v670, %v668
    %v775 = vpack.c.b16 %v671, %v669
    %v776 = vpack.c.b16 %v674, %v672
    %v777 = vpack.c.b16 %v675, %v673
    %v778 = vpack.c.b16 %v678, %v676
    %v779 = vpack.c.b16 %v679, %v677
    %v780 = vpack.c.b16 %v682, %v680
    %v781 = vpack.c.b16 %v683, %v681
    %v782 = vpack.c.b16 %v686, %v684
    %v783 = vpack.c.b16 %v687, %v685
    %v784 = vpack.c.b16 %v690, %v688
    %v785 = vpack.c.b16 %v691, %v689
    %v786 = vpack.c.b16 %v694, %v692
    %v787 = vpack.c.b16 %v695, %v693
    %v788 = vpack.c.b16 %v698, %v696
    %v789 = vpack.c.b16 %v699, %v697
    %v790 = vpack.c.b16 %v702, %v700
    %v791 = vpack.c.b16 %v703, %v701
    %v792 = vpack.c.b16 %v706, %v704
    %v793 = vpack.c.b16 %v707, %v705
    %v794 = vpack.c.b16 %v710, %v708
    %v795 = vpack.c.b16 %v711, %v709
    %v796 = vpack.c.b16 %v714, %v712
    %v797 = vpack.c.b16 %v715, %v713
    %v798 = vpack.c.b16 %v718, %v716
    %v799 = vpack.c.b16 %v719, %v717
    %v800 = vpack.c.b16 %v722, %v720
    %v801 = vpack.c.b16 %v723, %v721
    %v802 = vpack.c.b16 %v726, %v724
    %v803 = vpack.c.b16 %v727, %v725
    %v804 = vpack.c.b16 %v730, %v728
    %v805 = vpack.c.b16 %v731, %v729
    %v806 = vpack.c.b16 %v734, %v732
    %v807 = vpack.c.b16 %v735, %v733
    %v808 = vpack.c.b16 %v738, %v736
    %v809 = vpack.c.b16 %v739, %v737
    %v810 = vpack.c.b16 %v742, %v740
    %v811 = vpack.c.b16 %v743, %v741
    %v812 = vpack.c.b16 %v746, %v744
    %v813 = vpack.c.b16 %v747, %v745
    %v814 = vpack.c.b16 %v750, %v748
    %v815 = vpack.c.b16 %v751, %v749
    %880 = vmatprep.subr.bf16.mxu0 %v753
    %881 = vmatpush1.bf16.msra.mxu0 %v752
    %882 = vmatprep.subr.bf16.mxu0 %v755
    %883 = vmatpush1.bf16.msra.mxu0 %v754
    %884 = vmatprep.subr.bf16.mxu0 %v757
    %885 = vmatpush1.bf16.msra.mxu0 %v756
    %886 = vmatprep.subr.bf16.mxu0 %v759
    %887 = vmatpush1.bf16.msra.mxu0 %v758
    %888 = vmatprep.subr.bf16.mxu0 %v761
    %889 = vmatpush1.bf16.msra.mxu0 %v760
    %890 = vmatprep.subr.bf16.mxu0 %v763
    %891 = vmatpush1.bf16.msra.mxu0 %v762
    %892 = vmatprep.subr.bf16.mxu0 %v765
    %893 = vmatpush1.bf16.msra.mxu0 %v764
    %894 = vmatprep.subr.bf16.mxu0 %v767
    %895 = vmatpush1.bf16.msra.mxu0 %v766
    %896 = vmatprep.subr.bf16.mxu0 %v769
    %897 = vmatpush1.bf16.msra.mxu0 %v768
    %898 = vmatprep.subr.bf16.mxu0 %v771
    %899 = vmatpush1.bf16.msra.mxu0 %v770
    %900 = vmatprep.subr.bf16.mxu0 %v773
    %901 = vmatpush1.bf16.msra.mxu0 %v772
    %902 = vmatprep.subr.bf16.mxu0 %v775
    %903 = vmatpush1.bf16.msra.mxu0 %v774
    %904 = vmatprep.subr.bf16.mxu0 %v777
    %905 = vmatpush1.bf16.msra.mxu0 %v776
    %906 = vmatprep.subr.bf16.mxu0 %v779
    %907 = vmatpush1.bf16.msra.mxu0 %v778
    %908 = vmatprep.subr.bf16.mxu0 %v781
    %909 = vmatpush1.bf16.msra.mxu0 %v780
    %910 = vmatprep.subr.bf16.mxu0 %v783
    %911 = vmatpush1.bf16.msra.mxu0 %v782
    %912 = vmatprep.mubr.bf16.mxu0 %v453
    %913 = vmatmul.mubr.bf16.gmra.mrb[0].mxu0 %v452
    %v914 = vpop.f32.mrb[0].mxu0
    %v915 = vadd.f32 %v553, %v914
    %v916 = vpop.f32.mrb[0].mxu0
    %v917 = vadd.f32 %v557, %v916
    %v918 = vpop.f32.mrb[0].mxu0
    %v919 = vadd.f32 %v553, %v918
    %v920 = vpop.f32.mrb[0].mxu0
    %v921 = vadd.f32 %v557, %v920
    %922 = vmatprep.mubr.bf16.mxu0 %v457
    %923 = vmatmul.mubr.bf16.gmra.mrb[0].mxu0 %v456
    %v924 = vpop.f32.mrb[0].mxu0
    %v925 = vadd.f32 %v553, %v924
    %v926 = vpop.f32.mrb[0].mxu0
    %v927 = vadd.f32 %v557, %v926
    %v928 = vpop.f32.mrb[0].mxu0
    %v929 = vadd.f32 %v553, %v928
    %v930 = vpop.f32.mrb[0].mxu0
    %v931 = vadd.f32 %v557, %v930
    %932 = vmatprep.mubr.bf16.mxu0 %v461
    %933 = vmatmul.mubr.bf16.gmra.mrb[0].mxu0 %v460
    %v934 = vpop.f32.mrb[0].mxu0
    %v935 = vadd.f32 %v553, %v934
    %v936 = vpop.f32.mrb[0].mxu0
    %v937 = vadd.f32 %v557, %v936
    %v938 = vpop.f32.mrb[0].mxu0
    %v939 = vadd.f32 %v553, %v938
    %v940 = vpop.f32.mrb[0].mxu0
    %v941 = vadd.f32 %v557, %v940
    %942 = vmatprep.mubr.bf16.mxu0 %v465
    %943 = vmatmul.mubr.bf16.gmra.mrb[0].mxu0 %v464
    %v944 = vpop.f32.mrb[0].mxu0
    %v945 = vadd.f32 %v553, %v944
    %v946 = vpop.f32.mrb[0].mxu0
    %v947 = vadd.f32 %v557, %v946
    %v948 = vpop.f32.mrb[0].mxu0
    %v949 = vadd.f32 %v553, %v948
    %v950 = vpop.f32.mrb[0].mxu0
    %v951 = vadd.f32 %v557, %v950
    %952 = vmatprep.mubr.bf16.mxu0 %v469
    %953 = vmatmul.mubr.bf16.gmra.mrb[0].mxu0 %v468
    %v954 = vpop.f32.mrb[0].mxu0
    %v955 = vadd.f32 %v553, %v954
    %v956 = vpop.f32.mrb[0].mxu0
    %v957 = vadd.f32 %v557, %v956
    %v958 = vpop.f32.mrb[0].mxu0
    %v959 = vadd.f32 %v553, %v958
    %v960 = vpop.f32.mrb[0].mxu0
    %v961 = vadd.f32 %v557, %v960
    %962 = vmatprep.mubr.bf16.mxu0 %v473
    %963 = vmatmul.mubr.bf16.gmra.mrb[0].mxu0 %v472
    %v964 = vpop.f32.mrb[0].mxu0
    %v965 = vadd.f32 %v553, %v964
    %v966 = vpop.f32.mrb[0].mxu0
    %v967 = vadd.f32 %v557, %v966
    %v968 = vpop.f32.mrb[0].mxu0
    %v969 = vadd.f32 %v553, %v968
    %v970 = vpop.f32.mrb[0].mxu0
    %v971 = vadd.f32 %v557, %v970
    %972 = vmatprep.mubr.bf16.mxu0 %v477
    %973 = vmatmul.mubr.bf16.gmra.mrb[0].mxu0 %v476
    %v974 = vpop.f32.mrb[0].mxu0
    %v975 = vadd.f32 %v553, %v974
    %v976 = vpop.f32.mrb[0].mxu0
    %v977 = vadd.f32 %v557, %v976
    %v978 = vpop.f32.mrb[0].mxu0
    %v979 = vadd.f32 %v553, %v978
    %v980 = vpop.f32.mrb[0].mxu0
    %v981 = vadd.f32 %v557, %v980
    %982 = vmatprep.mubr.bf16.mxu0 %v481
    %983 = vmatmul.mubr.bf16.gmra.mrb[0].mxu0 %v480
    %v984 = vpop.f32.mrb[0].mxu0
    %v985 = vadd.f32 %v553, %v984
    %v986 = vpop.f32.mrb[0].mxu0
    %v987 = vadd.f32 %v557, %v986
    %v988 = vpop.f32.mrb[0].mxu0
    %v989 = vadd.f32 %v553, %v988
    %v990 = vpop.f32.mrb[0].mxu0
    %v991 = vadd.f32 %v557, %v990
    %992 = vdwg.mxu0
    %993 = vmatprep.subr.bf16.mxu0 %v785
    %994 = vmatpush1.bf16.msra.mxu0 %v784
    %995 = vmatprep.subr.bf16.mxu0 %v787
    %996 = vmatpush1.bf16.msra.mxu0 %v786
    %997 = vmatprep.subr.bf16.mxu0 %v789
    %998 = vmatpush1.bf16.msra.mxu0 %v788
    %999 = vmatprep.subr.bf16.mxu0 %v791
    %1000 = vmatpush1.bf16.msra.mxu0 %v790
    %1001 = vmatprep.subr.bf16.mxu0 %v793
    %1002 = vmatpush1.bf16.msra.mxu0 %v792
    %1003 = vmatprep.subr.bf16.mxu0 %v795
    %1004 = vmatpush1.bf16.msra.mxu0 %v794
    %1005 = vmatprep.subr.bf16.mxu0 %v797
    %1006 = vmatpush1.bf16.msra.mxu0 %v796
    %1007 = vmatprep.subr.bf16.mxu0 %v799
    %1008 = vmatpush1.bf16.msra.mxu0 %v798
    %1009 = vmatprep.subr.bf16.mxu0 %v801
    %1010 = vmatpush1.bf16.msra.mxu0 %v800
    %1011 = vmatprep.subr.bf16.mxu0 %v803
    %1012 = vmatpush1.bf16.msra.mxu0 %v802
    %1013 = vmatprep.subr.bf16.mxu0 %v805
    %1014 = vmatpush1.bf16.msra.mxu0 %v804
    %1015 = vmatprep.subr.bf16.mxu0 %v807
    %1016 = vmatpush1.bf16.msra.mxu0 %v806
    %1017 = vmatprep.subr.bf16.mxu0 %v809
    %1018 = vmatpush1.bf16.msra.mxu0 %v808
    %1019 = vmatprep.subr.bf16.mxu0 %v811
    %1020 = vmatpush1.bf16.msra.mxu0 %v810
    %1021 = vmatprep.subr.bf16.mxu0 %v813
    %1022 = vmatpush1.bf16.msra.mxu0 %v812
    %1023 = vmatprep.subr.bf16.mxu0 %v815
    %1024 = vmatpush1.bf16.msra.mxu0 %v814
    %1025 = vmatprep.mubr.bf16.mxu0 %v455
    %1026 = vmatmul.mubr.bf16.gmra.mrb[0].mxu0 %v454
    %v1027 = vpop.f32.mrb[0].mxu0
    %v1028 = vadd.f32 %v915, %v1027
    %v1029 = vpop.f32.mrb[0].mxu0
    %v1030 = vadd.f32 %v917, %v1029
    %v1031 = vpop.f32.mrb[0].mxu0
    %v1032 = vadd.f32 %v919, %v1031
    %v1033 = vpop.f32.mrb[0].mxu0
    %v1034 = vadd.f32 %v921, %v1033
    %1035 = vmatprep.mubr.bf16.mxu0 %v459
    %1036 = vmatmul.mubr.bf16.gmra.mrb[0].mxu0 %v458
    %v1037 = vpop.f32.mrb[0].mxu0
    %v1038 = vadd.f32 %v925, %v1037
    %v1039 = vpop.f32.mrb[0].mxu0
    %v1040 = vadd.f32 %v927, %v1039
    %v1041 = vpop.f32.mrb[0].mxu0
    %v1042 = vadd.f32 %v929, %v1041
    %v1043 = vpop.f32.mrb[0].mxu0
    %v1044 = vadd.f32 %v931, %v1043
    %1045 = vmatprep.mubr.bf16.mxu0 %v463
    %1046 = vmatmul.mubr.bf16.gmra.mrb[0].mxu0 %v462
    %v1047 = vpop.f32.mrb[0].mxu0
    %v1048 = vadd.f32 %v935, %v1047
    %v1049 = vpop.f32.mrb[0].mxu0
    %v1050 = vadd.f32 %v937, %v1049
    %v1051 = vpop.f32.mrb[0].mxu0
    %v1052 = vadd.f32 %v939, %v1051
    %v1053 = vpop.f32.mrb[0].mxu0
    %v1054 = vadd.f32 %v941, %v1053
    %1055 = vmatprep.mubr.bf16.mxu0 %v467
    %1056 = vmatmul.mubr.bf16.gmra.mrb[0].mxu0 %v466
    %v1057 = vpop.f32.mrb[0].mxu0
    %v1058 = vadd.f32 %v945, %v1057
    %v1059 = vpop.f32.mrb[0].mxu0
    %v1060 = vadd.f32 %v947, %v1059
    %v1061 = vpop.f32.mrb[0].mxu0
    %v1062 = vadd.f32 %v949, %v1061
    %v1063 = vpop.f32.mrb[0].mxu0
    %v1064 = vadd.f32 %v951, %v1063
    %1065 = vmatprep.mubr.bf16.mxu0 %v471
    %1066 = vmatmul.mubr.bf16.gmra.mrb[0].mxu0 %v470
    %v1067 = vpop.f32.mrb[0].mxu0
    %v1068 = vadd.f32 %v955, %v1067
    %v1069 = vpop.f32.mrb[0].mxu0
    %v1070 = vadd.f32 %v957, %v1069
    %v1071 = vpop.f32.mrb[0].mxu0
    %v1072 = vadd.f32 %v959, %v1071
    %v1073 = vpop.f32.mrb[0].mxu0
    %v1074 = vadd.f32 %v961, %v1073
    %1075 = vmatprep.mubr.bf16.mxu0 %v475
    %1076 = vmatmul.mubr.bf16.gmra.mrb[0].mxu0 %v474
    %v1077 = vpop.f32.mrb[0].mxu0
    %v1078 = vadd.f32 %v965, %v1077
    %v1079 = vpop.f32.mrb[0].mxu0
    %v1080 = vadd.f32 %v967, %v1079
    %v1081 = vpop.f32.mrb[0].mxu0
    %v1082 = vadd.f32 %v969, %v1081
    %v1083 = vpop.f32.mrb[0].mxu0
    %v1084 = vadd.f32 %v971, %v1083
    %1085 = vmatprep.mubr.bf16.mxu0 %v479
    %1086 = vmatmul.mubr.bf16.gmra.mrb[0].mxu0 %v478
    %v1087 = vpop.f32.mrb[0].mxu0
    %v1088 = vadd.f32 %v975, %v1087
    %v1089 = vpop.f32.mrb[0].mxu0
    %v1090 = vadd.f32 %v977, %v1089
    %v1091 = vpop.f32.mrb[0].mxu0
    %v1092 = vadd.f32 %v979, %v1091
    %v1093 = vpop.f32.mrb[0].mxu0
    %v1094 = vadd.f32 %v981, %v1093
    %1095 = vmatprep.mubr.bf16.mxu0 %v483
    %1096 = vmatmul.mubr.bf16.gmra.mrb[0].mxu0 %v482
    %v1097 = vpop.f32.mrb[0].mxu0
    %v1098 = vadd.f32 %v985, %v1097
    %v1099 = vpop.f32.mrb[0].mxu0
    %v1100 = vadd.f32 %v987, %v1099
    %v1101 = vpop.f32.mrb[0].mxu0
    %v1102 = vadd.f32 %v989, %v1101
    %v1103 = vpop.f32.mrb[0].mxu0
    %v1104 = vadd.f32 %v991, %v1103
    %1105 = vdwg.mxu0
    %v1106 = vmax.f32 %v1028, 0.0
    %v1107 = vmax.f32 %v1030, 0.0
    %v1108 = vmax.f32 %v1032, 0.0
    %v1109 = vmax.f32 %v1034, 0.0
    %v1110 = vmax.f32 %v1038, 0.0
    %v1111 = vmax.f32 %v1040, 0.0
    %v1112 = vmax.f32 %v1042, 0.0
    %v1113 = vmax.f32 %v1044, 0.0
    %v1114 = vmax.f32 %v1048, 0.0
    %v1115 = vmax.f32 %v1050, 0.0
    %v1116 = vmax.f32 %v1052, 0.0
    %v1117 = vmax.f32 %v1054, 0.0
    %v1118 = vmax.f32 %v1058, 0.0
    %v1119 = vmax.f32 %v1060, 0.0
    %v1120 = vmax.f32 %v1062, 0.0
    %v1121 = vmax.f32 %v1064, 0.0
    %v1122 = vmax.f32 %v1068, 0.0
    %v1123 = vmax.f32 %v1070, 0.0
    %v1124 = vmax.f32 %v1072, 0.0
    %v1125 = vmax.f32 %v1074, 0.0
    %v1126 = vmax.f32 %v1078, 0.0
    %v1127 = vmax.f32 %v1080, 0.0
    %v1128 = vmax.f32 %v1082, 0.0
    %v1129 = vmax.f32 %v1084, 0.0
    %v1130 = vmax.f32 %v1088, 0.0
    %v1131 = vmax.f32 %v1090, 0.0
    %v1132 = vmax.f32 %v1092, 0.0
    %v1133 = vmax.f32 %v1094, 0.0
    %v1134 = vmax.f32 %v1098, 0.0
    %v1135 = vmax.f32 %v1100, 0.0
    %v1136 = vmax.f32 %v1102, 0.0
    %v1137 = vmax.f32 %v1104, 0.0
    %v1138 = vld [vmem:[%s5] sm:$0x3]
    %v1140 = vlaneseq
    %v1141 = vshrl.u32 %v1140, 7
    %v1142 = vsub.s32 0, %v1141
    %v1143 = vrot.slane %v1138, %v1142
    %v1144 = vlaneseq
    %v1145 = vshrl.u32 %v1144, 7
    %v1146 = vsub.s32 1, %v1145
    %v1147 = vrot.slane %v1138, %v1146
    %v1150 = vmul.f32 %v1106, %v1143
    %v1151 = vmul.f32 %v1107, %v1147
    %v1152 = vmul.f32 %v1108, %v1143
    %v1153 = vmul.f32 %v1109, %v1147
    %v1154 = vmul.f32 %v1110, %v1143
    %v1155 = vmul.f32 %v1111, %v1147
    %v1156 = vmul.f32 %v1112, %v1143
    %v1157 = vmul.f32 %v1113, %v1147
    %v1158 = vmul.f32 %v1114, %v1143
    %v1159 = vmul.f32 %v1115, %v1147
    %v1160 = vmul.f32 %v1116, %v1143
    %v1161 = vmul.f32 %v1117, %v1147
    %v1162 = vmul.f32 %v1118, %v1143
    %v1163 = vmul.f32 %v1119, %v1147
    %v1164 = vmul.f32 %v1120, %v1143
    %v1165 = vmul.f32 %v1121, %v1147
    %v1166 = vmul.f32 %v1122, %v1143
    %v1167 = vmul.f32 %v1123, %v1147
    %v1168 = vmul.f32 %v1124, %v1143
    %v1169 = vmul.f32 %v1125, %v1147
    %v1170 = vmul.f32 %v1126, %v1143
    %v1171 = vmul.f32 %v1127, %v1147
    %v1172 = vmul.f32 %v1128, %v1143
    %v1173 = vmul.f32 %v1129, %v1147
    %v1174 = vmul.f32 %v1130, %v1143
    %v1175 = vmul.f32 %v1131, %v1147
    %v1176 = vmul.f32 %v1132, %v1143
    %v1177 = vmul.f32 %v1133, %v1147
    %v1178 = vmul.f32 %v1134, %v1143
    %v1179 = vmul.f32 %v1135, %v1147
    %v1180 = vmul.f32 %v1136, %v1143
    %v1181 = vmul.f32 %v1137, %v1147
    %v1182 = vadd.f32 %v1150, %v1151
    %1183 = vadd.xlane.f32.xlu0 %v1182
    %v1184 = vpop.xlane.xlu0 %1183
    %v1185 = vadd.f32 %v1152, %v1153
    %1186 = vadd.xlane.f32.xlu0 %v1185
    %v1187 = vpop.xlane.xlu0 %1186
    %v1188 = vadd.f32 %v1154, %v1155
    %1189 = vadd.xlane.f32.xlu0 %v1188
    %v1190 = vpop.xlane.xlu0 %1189
    %v1191 = vadd.f32 %v1156, %v1157
    %1192 = vadd.xlane.f32.xlu0 %v1191
    %v1193 = vpop.xlane.xlu0 %1192
    %v1194 = vadd.f32 %v1158, %v1159
    %1195 = vadd.xlane.f32.xlu0 %v1194
    %v1196 = vpop.xlane.xlu0 %1195
    %v1197 = vadd.f32 %v1160, %v1161
    %1198 = vadd.xlane.f32.xlu0 %v1197
    %v1199 = vpop.xlane.xlu0 %1198
    %v1200 = vadd.f32 %v1162, %v1163
    %1201 = vadd.xlane.f32.xlu0 %v1200
    %v1202 = vpop.xlane.xlu0 %1201
    %v1203 = vadd.f32 %v1164, %v1165
    %1204 = vadd.xlane.f32.xlu0 %v1203
    %v1205 = vpop.xlane.xlu0 %1204
    %v1206 = vadd.f32 %v1166, %v1167
    %1207 = vadd.xlane.f32.xlu0 %v1206
    %v1208 = vpop.xlane.xlu0 %1207
    %v1209 = vadd.f32 %v1168, %v1169
    %1210 = vadd.xlane.f32.xlu0 %v1209
    %v1211 = vpop.xlane.xlu0 %1210
    %v1212 = vadd.f32 %v1170, %v1171
    %1213 = vadd.xlane.f32.xlu0 %v1212
    %v1214 = vpop.xlane.xlu0 %1213
    %v1215 = vadd.f32 %v1172, %v1173
    %1216 = vadd.xlane.f32.xlu0 %v1215
    %v1217 = vpop.xlane.xlu0 %1216
    %v1218 = vadd.f32 %v1174, %v1175
    %1219 = vadd.xlane.f32.xlu0 %v1218
    %v1220 = vpop.xlane.xlu0 %1219
    %v1221 = vadd.f32 %v1176, %v1177
    %1222 = vadd.xlane.f32.xlu0 %v1221
    %v1223 = vpop.xlane.xlu0 %1222
    %v1224 = vadd.f32 %v1178, %v1179
    %1225 = vadd.xlane.f32.xlu0 %v1224
    %v1226 = vpop.xlane.xlu0 %1225
    %v1227 = vadd.f32 %v1180, %v1181
    %1228 = vadd.xlane.f32.xlu0 %v1227
    %v1229 = vpop.xlane.xlu0 %1228
    %s1230 = sld [smem:[#allocation2]]
    %v1231 = vstv %s1230
    %v1232 = vadd.f32 %v1184, %v1231
    %v1233 = vadd.f32 %v1187, %v1231
    %v1234 = vadd.f32 %v1190, %v1231
    %v1235 = vadd.f32 %v1193, %v1231
    %v1236 = vadd.f32 %v1196, %v1231
    %v1237 = vadd.f32 %v1199, %v1231
    %v1238 = vadd.f32 %v1202, %v1231
    %v1239 = vadd.f32 %v1205, %v1231
    %v1240 = vadd.f32 %v1208, %v1231
    %v1241 = vadd.f32 %v1211, %v1231
    %v1242 = vadd.f32 %v1214, %v1231
    %v1243 = vadd.f32 %v1217, %v1231
    %v1244 = vadd.f32 %v1220, %v1231
    %v1245 = vadd.f32 %v1223, %v1231
    %v1246 = vadd.f32 %v1226, %v1231
    %v1247 = vadd.f32 %v1229, %v1231
    %v1264 = vlaneseq
    %v1265 = vand.u32 %v1264, 127
    %v1266 = vlaneseq
    %v1267 = vshrl.u32 %v1266, 7
    %v1268 = vsub.s32 %v1265, %v1267
    %v1269 = vrot.slane %v1232, %v1268
    %v1270 = vadd.s32 %v1265, 4294967288
    %v1271 = vlaneseq
    %v1272 = vshrl.u32 %v1271, 7
    %v1273 = vsub.s32 %v1270, %v1272
    %v1274 = vrot.slane %v1233, %v1273
    %vm1275 = vcmask 130112
    %v1276 = vsel %vm1275, %v1274, %v1269
    %v1277 = vadd.s32 %v1265, 4294967280
    %v1278 = vlaneseq
    %v1279 = vshrl.u32 %v1278, 7
    %v1280 = vsub.s32 %v1277, %v1279
    %v1281 = vrot.slane %v1234, %v1280
    %vm1282 = vcmask 195712
    %v1283 = vsel %vm1282, %v1281, %v1276
    %v1284 = vadd.s32 %v1265, 4294967272
    %v1285 = vlaneseq
    %v1286 = vshrl.u32 %v1285, 7
    %v1287 = vsub.s32 %v1284, %v1286
    %v1288 = vrot.slane %v1235, %v1287
    %vm1289 = vcmask 261312
    %v1290 = vsel %vm1289, %v1288, %v1283
    %v1291 = vadd.s32 %v1265, 4294967264
    %v1292 = vlaneseq
    %v1293 = vshrl.u32 %v1292, 7
    %v1294 = vsub.s32 %v1291, %v1293
    %v1295 = vrot.slane %v1236, %v1294
    %vm1296 = vcmask 326912
    %v1297 = vsel %vm1296, %v1295, %v1290
    %v1298 = vadd.s32 %v1265, 4294967256
    %v1299 = vlaneseq
    %v1300 = vshrl.u32 %v1299, 7
    %v1301 = vsub.s32 %v1298, %v1300
    %v1302 = vrot.slane %v1237, %v1301
    %vm1303 = vcmask 392512
    %v1304 = vsel %vm1303, %v1302, %v1297
    %v1305 = vadd.s32 %v1265, 4294967248
    %v1306 = vlaneseq
    %v1307 = vshrl.u32 %v1306, 7
    %v1308 = vsub.s32 %v1305, %v1307
    %v1309 = vrot.slane %v1238, %v1308
    %vm1310 = vcmask 458112
    %v1311 = vsel %vm1310, %v1309, %v1304
    %v1312 = vadd.s32 %v1265, 4294967240
    %v1313 = vlaneseq
    %v1314 = vshrl.u32 %v1313, 7
    %v1315 = vsub.s32 %v1312, %v1314
    %v1316 = vrot.slane %v1239, %v1315
    %vm1317 = vcmask 523712
    %v1318 = vsel %vm1317, %v1316, %v1311
    %v1319 = vadd.s32 %v1265, 4294967232
    %v1320 = vlaneseq
    %v1321 = vshrl.u32 %v1320, 7
    %v1322 = vsub.s32 %v1319, %v1321
    %v1323 = vrot.slane %v1240, %v1322
    %vm1324 = vcmask 589312
    %v1325 = vsel %vm1324, %v1323, %v1318
    %v1326 = vadd.s32 %v1265, 4294967224
    %v1327 = vlaneseq
    %v1328 = vshrl.u32 %v1327, 7
    %v1329 = vsub.s32 %v1326, %v1328
    %v1330 = vrot.slane %v1241, %v1329
    %vm1331 = vcmask 654912
    %v1332 = vsel %vm1331, %v1330, %v1325
    %v1333 = vadd.s32 %v1265, 4294967216
    %v1334 = vlaneseq
    %v1335 = vshrl.u32 %v1334, 7
    %v1336 = vsub.s32 %v1333, %v1335
    %v1337 = vrot.slane %v1242, %v1336
    %vm1338 = vcmask 720512
    %v1339 = vsel %vm1338, %v1337, %v1332
    %v1340 = vadd.s32 %v1265, 4294967208
    %v1341 = vlaneseq
    %v1342 = vshrl.u32 %v1341, 7
    %v1343 = vsub.s32 %v1340, %v1342
    %v1344 = vrot.slane %v1243, %v1343
    %vm1345 = vcmask 786112
    %v1346 = vsel %vm1345, %v1344, %v1339
    %v1347 = vadd.s32 %v1265, 4294967200
    %v1348 = vlaneseq
    %v1349 = vshrl.u32 %v1348, 7
    %v1350 = vsub.s32 %v1347, %v1349
    %v1351 = vrot.slane %v1244, %v1350
    %vm1352 = vcmask 851712
    %v1353 = vsel %vm1352, %v1351, %v1346
    %v1354 = vadd.s32 %v1265, 4294967192
    %v1355 = vlaneseq
    %v1356 = vshrl.u32 %v1355, 7
    %v1357 = vsub.s32 %v1354, %v1356
    %v1358 = vrot.slane %v1245, %v1357
    %vm1359 = vcmask 917312
    %v1360 = vsel %vm1359, %v1358, %v1353
    %v1361 = vadd.s32 %v1265, 4294967184
    %v1362 = vlaneseq
    %v1363 = vshrl.u32 %v1362, 7
    %v1364 = vsub.s32 %v1361, %v1363
    %v1365 = vrot.slane %v1246, %v1364
    %vm1366 = vcmask 982912
    %v1367 = vsel %vm1366, %v1365, %v1360
    %v1368 = vadd.s32 %v1265, 4294967176
    %v1369 = vlaneseq
    %v1370 = vshrl.u32 %v1369, 7
    %v1371 = vsub.s32 %v1368, %v1370
    %v1372 = vrot.slane %v1247, %v1371
    %vm1373 = vcmask 1048512
    %v1374 = vsel %vm1373, %v1372, %v1367
    %1376 = vst [vmem:[#allocation6] sm:$0x1] %v1374
    // Predicated region
    $region34: #{tpu_custom_call.1} parent=1 // pred_check
      _
    $region35: #{tpu_custom_call.1} parent=1 // pred_check_branch
      %1378 = sbr.rel (0) target = $region37
    $region36: #{tpu_custom_call.1} parent=1 // pred_region
      %s1380 = ssub.s32 16, 16
      %1381 = vsyncadd [#allocation5], %s1380
      %s1383 = sshll.u32 [#allocation6], 4
      %s1384 = int_to_ptr.vmem [resolvable:$true] %s1383
      %1386 = dma.vmem_to_hbm [thread:$0]  %s1384, 16, %s7, [#allocation5]
    $region37: #{tpu_custom_call.1} parent=1 // pred_fallthru
      _
    // Predicated region
    $region38: #{tpu_custom_call.1} parent=1 // pred_check
      _
    $region39: #{tpu_custom_call.1} parent=1 // pred_check_branch
      %1388 = sbr.rel (0) target = $region41
    $region40: #{tpu_custom_call.1} parent=1 // pred_region
      %1389 = dma.done [#allocation5], 16
    $region41: #{tpu_custom_call.1} parent=1 // pred_fallthru
      _
    %1390 = vsyncpa [#allocation4], 1
    %1391 = vsyncpa [#allocation5], 1

</llo_original>
